<compile_context>
chip_gen: v6e
topology: v6e:2x2x1
jax: 0.10.0
libtpu: 0.0.40
codegen_flags: <defaults>
</compile_context>

<pallas_src>
import functools

import numpy as np
import jax
import jax.numpy as jnp
from jax import lax
from jax.experimental import pallas as pl
from jax.experimental.pallas import tpu as pltpu


_BN_EPS = 1e-5
_VMEM_LIMIT = 48 * 1024 * 1024  # v7x has 64 MiB/TC; leave headroom (footprint is ~MBs)


# -----------------------------------------------------------------------------
# stride=1 fused kernel: 1x1 conv + BN1 + ReLU  ->  depthwise kxk + BN2
#                        ->  (shuffle-folded) 1x1 conv + BN3 + residual + ReLU
# One grid step per image; everything between the two HBM touches stays in VMEM.
# -----------------------------------------------------------------------------
def _fused_s1_kernel(x_ref, w1_ref, s1_ref, b1_ref, wdw_ref, s2_ref, b2_ref,
                     w3_ref, s3_ref, b3_ref, o_ref, xpad_ref, *, ksize, pad, H, W):
    inp = x_ref.shape[-1]
    mid = w1_ref.shape[1]
    M = H * W
    Hp, Wp = H + 2 * pad, W + 2 * pad

    # --- fused first 1x1 conv + BN1 + ReLU (h1 never leaves VMEM) -------------
    x2d = x_ref[0].reshape(M, inp)                      # also reused as the residual
    h1 = jnp.dot(x2d.astype(jnp.bfloat16), w1_ref[...],
                 preferred_element_type=jnp.float32)
    h1 = jnp.maximum(h1 * s1_ref[...] + b1_ref[...], 0.0)

    # zero only the halo of the padded scratch, then drop h1 into the interior
    if pad > 0:
        zrow = jnp.zeros((pad, Wp, mid), jnp.float32)
        xpad_ref[0:pad, :, :] = zrow
        xpad_ref[pad + H:Hp, :, :] = zrow
        zcol = jnp.zeros((Hp, pad, mid), jnp.float32)
        xpad_ref[:, 0:pad, :] = zcol
        xpad_ref[:, pad + W:Wp, :] = zcol
    xpad_ref[pad:pad + H, pad:pad + W, :] = h1.reshape(H, W, mid)

    # --- depthwise kxk conv + BN2: k*k whole-image accumulations (vectorized) --
    acc = jnp.zeros((H, W, mid), jnp.float32)
    for kh in range(ksize):
        for kw in range(ksize):
            t = kh * ksize + kw
            acc = acc + xpad_ref[kh:kh + H, kw:kw + W, :] * wdw_ref[t]
    h2 = (acc * s2_ref[...] + b2_ref[...]).reshape(M, mid)

    # --- second 1x1 conv (channel shuffle folded into w3) + BN3 + residual + ReLU
    y = jnp.dot(h2.astype(jnp.bfloat16), w3_ref[...],
                preferred_element_type=jnp.float32)
    y = y * s3_ref[...] + b3_ref[...] + x2d             # stride=1 => inp == oup
    o_ref[0] = jnp.maximum(y, 0.0).astype(o_ref.dtype)


def fused_block_stride1(x_nhwc, w1_bf16, s1, b1, wdw4, s2, b2, w3_bf16, s3, b3,
                        *, ksize, pad):
    N, H, W, inp = x_nhwc.shape
    mid = w1_bf16.shape[1]
    oup = w3_bf16.shape[1]
    M = H * W
    kernel = functools.partial(_fused_s1_kernel, ksize=ksize, pad=pad, H=H, W=W)
    return pl.pallas_call(
        kernel,
        grid=(N,),
        in_specs=[
            pl.BlockSpec((1, H, W, inp), lambda n: (n, 0, 0, 0)),
            pl.BlockSpec((inp, mid), lambda n: (0, 0)),
            pl.BlockSpec((1, mid), lambda n: (0, 0)),
            pl.BlockSpec((1, mid), lambda n: (0, 0)),
            pl.BlockSpec((ksize * ksize, 1, 1, mid), lambda n: (0, 0, 0, 0)),
            pl.BlockSpec((1, 1, mid), lambda n: (0, 0, 0)),
            pl.BlockSpec((1, 1, mid), lambda n: (0, 0, 0)),
            pl.BlockSpec((mid, oup), lambda n: (0, 0)),
            pl.BlockSpec((1, oup), lambda n: (0, 0)),
            pl.BlockSpec((1, oup), lambda n: (0, 0)),
        ],
        out_specs=pl.BlockSpec((1, M, oup), lambda n: (n, 0, 0)),
        out_shape=jax.ShapeDtypeStruct((N, M, oup), x_nhwc.dtype),
        scratch_shapes=[pltpu.VMEM((H + 2 * pad, W + 2 * pad, mid), jnp.float32)],
        compiler_params=pltpu.CompilerParams(
            dimension_semantics=("parallel",),
            vmem_limit_bytes=_VMEM_LIMIT),
    )(x_nhwc, w1_bf16,
      s1.reshape(1, mid).astype(jnp.float32), b1.reshape(1, mid).astype(jnp.float32),
      wdw4,
      s2.reshape(1, 1, mid).astype(jnp.float32), b2.reshape(1, 1, mid).astype(jnp.float32),
      w3_bf16,
      s3.reshape(1, oup).astype(jnp.float32), b3.reshape(1, oup).astype(jnp.float32))


# -----------------------------------------------------------------------------
# stride=2 fused kernel: per stride-phase 1x1 conv + BN1 + ReLU into VMEM,
#   depthwise kxk/s2 conv + BN2 (vectorized over the output plane),
#   (shuffle-folded) 1x1 conv + BN3 + ReLU  -> main output,
#   AvgPool2d(3,2,1) on x  -> proj output.   Two lane-dense full-block outputs.
# -----------------------------------------------------------------------------
def _fused_s2_kernel(xph_ref, w1_ref, s1_ref, b1_ref, wdw_ref, s2_ref, b2_ref,
                     w3_ref, s3_ref, b3_ref, proj_ref, main_ref, h1ph_ref,
                     *, ksize, oh, ow, inp, halo):
    rh, rw = xph_ref.shape[2], xph_ref.shape[3]
    mid = w1_ref.shape[1]
    Mp = rh * rw
    M2 = oh * ow
    st = 2

    w1 = w1_ref[...]
    s1 = s1_ref[...]
    b1 = b1_ref[...]

    # --- fused first 1x1 conv + BN1 + ReLU, computed per stride-phase into VMEM
    for p in range(st * st):
        xp = xph_ref[0, p].reshape(Mp, inp)
        hp = jnp.dot(xp.astype(jnp.bfloat16), w1, preferred_element_type=jnp.float32)
        hp = jnp.maximum(hp * s1 + b1, 0.0)
        h1ph_ref[p] = hp.reshape(rh, rw, mid)
        # The depthwise halo must be exactly zero: the pointwise turns zero padding
        # into relu(b1) != 0, so zero the statically-known invalid border per phase.
        r0, r1, c0, c1 = halo[p]
        if r0 > 0:
            h1ph_ref[p, 0:r0, :, :] = jnp.zeros((r0, rw, mid), jnp.float32)
        if r1 < rh:
            h1ph_ref[p, r1:rh, :, :] = jnp.zeros((rh - r1, rw, mid), jnp.float32)
        if c0 > 0:
            h1ph_ref[p, :, 0:c0, :] = jnp.zeros((rh, c0, mid), jnp.float32)
        if c1 < rw:
            h1ph_ref[p, :, c1:rw, :] = jnp.zeros((rh, rw - c1, mid), jnp.float32)

    # --- proj branch: AvgPool2d(3, 2, 1) (count_include_pad -> uniform 1/9 taps)
    pacc = jnp.zeros((oh, ow, inp), jnp.float32)
    for kh in range(3):
        for kw in range(3):
            p_idx = (kh % st) * st + (kw % st)
            ih, iw = kh // st, kw // st
            pacc = pacc + xph_ref[0, p_idx, ih:ih + oh, iw:iw + ow, :]
    proj_ref[0] = (pacc * jnp.float32(1.0 / 9.0)).reshape(M2, inp).astype(proj_ref.dtype)

    # --- main branch: depthwise kxk stride-2 conv + BN2, vectorized over the image
    acc = jnp.zeros((oh, ow, mid), jnp.float32)
    for kh in range(ksize):
        for kw in range(ksize):
            p_idx = (kh % st) * st + (kw % st)
            ih, iw = kh // st, kw // st
            t = kh * ksize + kw
            acc = acc + h1ph_ref[p_idx, ih:ih + oh, iw:iw + ow, :] * wdw_ref[t]
    h2 = (acc * s2_ref[...] + b2_ref[...]).reshape(M2, mid)

    # --- second 1x1 conv (channel shuffle folded into w3) + BN3 + ReLU
    y = jnp.dot(h2.astype(jnp.bfloat16), w3_ref[...],
                preferred_element_type=jnp.float32)
    main_ref[0] = jnp.maximum(y * s3_ref[...] + b3_ref[...], 0.0).astype(main_ref.dtype)


def _phase_valid_range(phase, pad, size, rdim):
    """Phase indices i with pad <= phase + 2*i <= pad + size - 1, clipped to [0, rdim)."""
    lo = max(0, (pad - phase + 1) // 2)
    hi = min(rdim, (pad + size - 1 - phase) // 2 + 1)
    return lo, hi


def fused_block_stride2(xph, w1_bf16, s1, b1, wdw4, s2, b2, w3_bf16, s3, b3,
                        *, H, W, ksize, pad, oh, ow, inp, oup):
    N = xph.shape[0]
    rh, rw = xph.shape[2], xph.shape[3]
    mid = w1_bf16.shape[1]
    outputs = oup - inp
    M2 = oh * ow

    halo = []
    for ph in range(2):
        for pw_ in range(2):
            r0, r1 = _phase_valid_range(ph, pad, H, rh)
            c0, c1 = _phase_valid_range(pw_, pad, W, rw)
            halo.append((r0, r1, c0, c1))
    halo = tuple(halo)

    kernel = functools.partial(_fused_s2_kernel, ksize=ksize, oh=oh, ow=ow,
                               inp=inp, halo=halo)
    return pl.pallas_call(
        kernel,
        grid=(N,),
        in_specs=[
            pl.BlockSpec((1, 4, rh, rw, inp), lambda n: (n, 0, 0, 0, 0)),
            pl.BlockSpec((inp, mid), lambda n: (0, 0)),
            pl.BlockSpec((1, mid), lambda n: (0, 0)),
            pl.BlockSpec((1, mid), lambda n: (0, 0)),
            pl.BlockSpec((ksize * ksize, 1, 1, mid), lambda n: (0, 0, 0, 0)),
            pl.BlockSpec((1, 1, mid), lambda n: (0, 0, 0)),
            pl.BlockSpec((1, 1, mid), lambda n: (0, 0, 0)),
            pl.BlockSpec((mid, outputs), lambda n: (0, 0)),
            pl.BlockSpec((1, outputs), lambda n: (0, 0)),
            pl.BlockSpec((1, outputs), lambda n: (0, 0)),
        ],
        out_specs=(pl.BlockSpec((1, M2, inp), lambda n: (n, 0, 0)),
                   pl.BlockSpec((1, M2, outputs), lambda n: (n, 0, 0))),
        out_shape=(jax.ShapeDtypeStruct((N, M2, inp), xph.dtype),
                   jax.ShapeDtypeStruct((N, M2, outputs), xph.dtype)),
        scratch_shapes=[pltpu.VMEM((4, rh, rw, mid), jnp.float32)],
        compiler_params=pltpu.CompilerParams(
            dimension_semantics=("parallel",),
            vmem_limit_bytes=_VMEM_LIMIT),
    )(xph, w1_bf16,
      s1.reshape(1, mid).astype(jnp.float32), b1.reshape(1, mid).astype(jnp.float32),
      wdw4,
      s2.reshape(1, 1, mid).astype(jnp.float32), b2.reshape(1, 1, mid).astype(jnp.float32),
      w3_bf16,
      s3.reshape(1, outputs).astype(jnp.float32),
      b3.reshape(1, outputs).astype(jnp.float32))


# -----------------------------------------------------------------------------
# Wrapper glue.
# -----------------------------------------------------------------------------
def _phase_decompose(x_nhwc, ksize, stride, pad):
    """Stride-phase decomposition of the (zero-padded) input so every strided conv /
    pool tap becomes a contiguous slice in-kernel.  The phase width is padded to a
    multiple of 8 so the in-kernel (rh, rw, C) -> (rh*rw, C) flatten is layout-free."""
    N, H, W, C = x_nhwc.shape
    oh = (H + 2 * pad - ksize) // stride + 1
    ow = (W + 2 * pad - ksize) // stride + 1
    s = stride
    rh = oh + (ksize - 1) // s
    rw = ow + (ksize - 1) // s
    rw_pad = ((rw + 7) // 8) * 8
    xpad = jnp.pad(x_nhwc, ((0, 0), (pad, pad), (pad, pad), (0, 0)))
    phases = []
    for ph in range(s):
        for pw in range(s):
            p = xpad[:, ph::s, pw::s, :][:, :rh, :rw, :]
            p = jnp.pad(p, ((0, 0), (0, rh - p.shape[1]),
                            (0, rw_pad - p.shape[2]), (0, 0)))
            phases.append(p)
    xph = jnp.stack(phases, axis=1)           # (N, s*s, rh, rw_pad, C)
    return xph, oh, ow


def _grouped_pw_to_dense(w, groups):
    """(out_ch, in_per_group) grouped 1x1 conv weight -> block-diagonal (in_total, out_ch)."""
    out_ch, in_pg = w.shape
    out_pg = out_ch // groups
    dense = jnp.zeros((in_pg * groups, out_ch), w.dtype)
    for g in range(groups):
        blk = w[g * out_pg:(g + 1) * out_pg, :].T
        dense = dense.at[g * in_pg:(g + 1) * in_pg, g * out_pg:(g + 1) * out_pg].set(blk)
    return dense


def _fold_bn(bn):
    gamma, beta, mean, var = bn
    scale = gamma / jnp.sqrt(var + _BN_EPS)
    return scale, beta - mean * scale


def init_params(key, cfg):
    inp, oup, group = cfg["inp"], cfg["oup"], cfg["group"]
    first_group, mid = cfg["first_group"], cfg["mid_channels"]
    ksize, stride = cfg["ksize"], cfg["stride"]
    g1 = 1 if first_group else group
    outputs = oup - inp if stride == 2 else oup
    ks = jax.random.split(key, 6)

    def rnd(k, shape, s=0.2):
        return s * jax.random.normal(k, shape, jnp.float32)

    def bn_params(k, c):
        k1, k2, k3, k4 = jax.random.split(k, 4)
        gamma = 1.0 + 0.1 * jax.random.normal(k1, (c,), jnp.float32)
        beta = 0.1 * jax.random.normal(k2, (c,), jnp.float32)
        mean = 0.1 * jax.random.normal(k3, (c,), jnp.float32)
        var = 0.5 + jnp.abs(jax.random.normal(k4, (c,), jnp.float32))
        return (gamma, beta, mean, var)

    return dict(
        w1=rnd(ks[0], (mid, inp // g1)),          # Conv2d(inp, mid, 1, groups=g1), no bias
        wdw=rnd(ks[1], (mid, ksize, ksize)),      # Conv2d(mid, mid, k, groups=mid), squeezed
        w3=rnd(ks[2], (outputs, mid // group)),   # Conv2d(mid, outputs, 1, groups=group)
        bn1=bn_params(ks[3], mid),
        bn2=bn_params(ks[4], mid),
        bn3=bn_params(ks[5], outputs),
    )


def shuffle_v1_block_forward(x_nchw, params, cfg):
    inp, oup, group = cfg["inp"], cfg["oup"], cfg["group"]
    first_group, mid = cfg["first_group"], cfg["mid_channels"]
    ksize, stride = cfg["ksize"], cfg["stride"]
    assert stride in (1, 2)
    pad = ksize // 2
    N, C, H, W = x_nchw.shape
    assert C == inp
    if stride == 1:
        assert inp == oup, "stride=1 residual add requires inp == oup"

    x = jnp.transpose(x_nchw, (0, 2, 3, 1))                    # NHWC (boundary transpose)

    # Fold grouped 1x1 conv weights to block-diagonal dense matrices; fold the channel
    # shuffle into w3's rows (free on the MXU); pre-cast matmul weights to bf16.
    g1 = 1 if first_group else group
    w1_dense = _grouped_pw_to_dense(params["w1"], g1)          # (inp, mid)
    w3_dense = _grouped_pw_to_dense(params["w3"], group)       # (mid, outputs)
    if group > 1:
        gc = mid // group
        perm = jnp.arange(mid).reshape(gc, group).T.reshape(-1)
        w3_dense = jnp.zeros_like(w3_dense).at[perm, :].set(w3_dense)
    w1_bf16 = w1_dense.astype(jnp.bfloat16)
    w3_bf16 = w3_dense.astype(jnp.bfloat16)

    s1, b1 = _fold_bn(params["bn1"])
    s2, b2 = _fold_bn(params["bn2"])
    s3, b3 = _fold_bn(params["bn3"])

    # depthwise taps, laid out (k*k, 1, 1, mid) so in-kernel tap loads are broadcast-ready
    wdw4 = params["wdw"].reshape(mid, ksize * ksize).T.reshape(
        ksize * ksize, 1, 1, mid).astype(jnp.float32)

    if stride == 1:
        y2d = fused_block_stride1(x, w1_bf16, s1, b1, wdw4, s2, b2, w3_bf16, s3, b3,
                                  ksize=ksize, pad=pad)
        oh, ow = H, W
    else:
        assert ksize == 3, "stride=2 fused path assumes ksize == 3"  # TODO(synk): general k
        xph, oh, ow = _phase_decompose(x, ksize, 2, pad)
        proj2d, main2d = fused_block_stride2(
            xph, w1_bf16, s1, b1, wdw4, s2, b2, w3_bf16, s3, b3,
            H=H, W=W, ksize=ksize, pad=pad, oh=oh, ow=ow, inp=inp, oup=oup)
        y2d = jnp.concatenate([proj2d, main2d], axis=-1)

    # (N, oh*ow, oup) -> NCHW (boundary transpose required by the module interface)
    return jnp.transpose(y2d, (0, 2, 1)).reshape(N, oup, oh, ow)


# -----------------------------------------------------------------------------
# Pure-JAX reference (verification only).
# -----------------------------------------------------------------------------
def reference_forward(x_nchw, params, cfg):
    inp, oup, group = cfg["inp"], cfg["oup"], cfg["group"]
    first_group, mid = cfg["first_group"], cfg["mid_channels"]
    ksize, stride = cfg["ksize"], cfg["stride"]
    pad = ksize // 2
    outputs = oup - inp if stride == 2 else oup
    dn = ("NCHW", "OIHW", "NCHW")

    def bn(h, p):
        gamma, beta, mean, var = p
        return (gamma[None, :, None, None] * (h - mean[None, :, None, None])
                / jnp.sqrt(var[None, :, None, None] + _BN_EPS)
                + beta[None, :, None, None])

    g1 = 1 if first_group else group
    w1 = params["w1"].reshape(mid, inp // g1, 1, 1)
    h = lax.conv_general_dilated(x_nchw, w1, (1, 1), [(0, 0), (0, 0)],
                                 dimension_numbers=dn, feature_group_count=g1,
                                 precision=lax.Precision.HIGHEST)
    h = jax.nn.relu(bn(h, params["bn1"]))
    wdw = params["wdw"].reshape(mid, 1, ksize, ksize)
    h = lax.conv_general_dilated(h, wdw, (stride, stride), [(pad, pad), (pad, pad)],
                                 dimension_numbers=dn, feature_group_count=mid,
                                 precision=lax.Precision.HIGHEST)
    h = bn(h, params["bn2"])
    if group > 1:
        B, Cc, Hh, Ww = h.shape
        gc = Cc // group
        h = h.reshape(B, gc, group, Hh, Ww).transpose(0, 2, 1, 3, 4).reshape(B, Cc, Hh, Ww)
    w3 = params["w3"].reshape(outputs, mid // group, 1, 1)
    h = lax.conv_general_dilated(h, w3, (1, 1), [(0, 0), (0, 0)],
                                 dimension_numbers=dn, feature_group_count=group,
                                 precision=lax.Precision.HIGHEST)
    h = bn(h, params["bn3"])
    if stride == 1:
        return jax.nn.relu(h + x_nchw)
    summed = lax.reduce_window(x_nchw, 0.0, lax.add, (1, 1, 3, 3), (1, 1, 2, 2),
                               [(0, 0), (0, 0), (1, 1), (1, 1)])
    return jnp.concatenate([summed / 9.0, jax.nn.relu(h)], axis=1)


if __name__ == "__main__":
    key = jax.random.PRNGKey(0)
    kx, kp1, kp2 = jax.random.split(key, 3)
    x = jax.random.normal(kx, (2, 8, 16, 16), jnp.float32)

    # Config 1: stride=1 residual block (group=2, first_group=False)
    cfg1 = dict(inp=8, oup=8, group=2, first_group=False, mid_channels=8, ksize=3, stride=1)
    p1 = init_params(kp1, cfg1)
    out1 = jax.block_until_ready(shuffle_v1_block_forward(x, p1, cfg1))
    ref1 = jax.block_until_ready(reference_forward(x, p1, cfg1))
    np.testing.assert_allclose(np.asarray(out1), np.asarray(ref1), rtol=3e-2, atol=3e-2)

    # Config 2: stride=2 downsampling block (group=2, first_group=True)
    cfg2 = dict(inp=8, oup=16, group=2, first_group=True, mid_channels=8, ksize=3, stride=2)
    p2 = init_params(kp2, cfg2)
    out2 = jax.block_until_ready(shuffle_v1_block_forward(x, p2, cfg2))
    ref2 = jax.block_until_ready(reference_forward(x, p2, cfg2))
    np.testing.assert_allclose(np.asarray(out2), np.asarray(ref2), rtol=3e-2, atol=3e-2)

    print("KERNEL_OK")
</pallas_src>

<mosaic_0001>
module attributes {stable_mosaic.version = 11 : i64} {
  func.func @_fused_s1_kernel(%arg0: i32, %arg1: memref<1x16x16x8xf32, #tpu.memory_space<vmem>>, %arg2: memref<8x8xbf16, #tpu.memory_space<vmem>>, %arg3: memref<1x8xf32, #tpu.memory_space<vmem>>, %arg4: memref<1x8xf32, #tpu.memory_space<vmem>>, %arg5: memref<9x1x1x8xf32, #tpu.memory_space<vmem>>, %arg6: memref<1x1x8xf32, #tpu.memory_space<vmem>>, %arg7: memref<1x1x8xf32, #tpu.memory_space<vmem>>, %arg8: memref<8x8xbf16, #tpu.memory_space<vmem>>, %arg9: memref<1x8xf32, #tpu.memory_space<vmem>>, %arg10: memref<1x8xf32, #tpu.memory_space<vmem>>, %arg11: memref<1x256x8xf32, #tpu.memory_space<vmem>>, %arg12: memref<18x18x8xf32, #tpu.memory_space<vmem>>) attributes {dimension_semantics = [#tpu.dimension_semantics<parallel>], iteration_bounds = array<i64: 2>, scalar_prefetch = 0 : i64, scratch_operands = 1 : i64, tpu.core_type = #tpu.core_type<tc>, window_params = [{transform_indices = @transform_0, window_bounds = array<i64: 1, 16, 16, 8>}, {pipeline_mode = #tpu.pipeline_mode<synchronous>, transform_indices = @transform_1, window_bounds = array<i64: 8, 8>}, {pipeline_mode = #tpu.pipeline_mode<synchronous>, transform_indices = @transform_2, window_bounds = array<i64: 1, 8>}, {pipeline_mode = #tpu.pipeline_mode<synchronous>, transform_indices = @transform_3, window_bounds = array<i64: 1, 8>}, {pipeline_mode = #tpu.pipeline_mode<synchronous>, transform_indices = @transform_4, window_bounds = array<i64: 9, 1, 1, 8>}, {pipeline_mode = #tpu.pipeline_mode<synchronous>, transform_indices = @transform_5, window_bounds = array<i64: 1, 1, 8>}, {pipeline_mode = #tpu.pipeline_mode<synchronous>, transform_indices = @transform_6, window_bounds = array<i64: 1, 1, 8>}, {pipeline_mode = #tpu.pipeline_mode<synchronous>, transform_indices = @transform_7, window_bounds = array<i64: 8, 8>}, {pipeline_mode = #tpu.pipeline_mode<synchronous>, transform_indices = @transform_8, window_bounds = array<i64: 1, 8>}, {pipeline_mode = #tpu.pipeline_mode<synchronous>, transform_indices = @transform_9, window_bounds = array<i64: 1, 8>}, {transform_indices = @transform_10, window_bounds = array<i64: 1, 256, 8>}]} {
    %c0 = arith.constant 0 : index
    %c0_0 = arith.constant 0 : index
    %c0_1 = arith.constant 0 : index
    %c0_2 = arith.constant 0 : index
    %0 = vector.load %arg1[%c0, %c0_0, %c0_1, %c0_2] : memref<1x16x16x8xf32, #tpu.memory_space<vmem>>, vector<1x16x16x8xf32>
    %1 = vector.shape_cast %0 : vector<1x16x16x8xf32> to vector<16x16x8xf32>
    %2 = vector.shape_cast %1 : vector<16x16x8xf32> to vector<256x8xf32>
    %3 = arith.truncf %2 : vector<256x8xf32> to vector<256x8xbf16>
    %c0_3 = arith.constant 0 : index
    %c0_4 = arith.constant 0 : index
    %4 = vector.load %arg2[%c0_3, %c0_4] : memref<8x8xbf16, #tpu.memory_space<vmem>>, vector<8x8xbf16>
    %cst = arith.constant dense<0.000000e+00> : vector<256x8xf32>
    %5 = tpu.matmul %3, %4, %cst {dimension_numbers = #tpu.dot_dimension_numbers<[1], [0], [0], [1], [0, 0, 1, 1], [], []>} : vector<256x8xbf16>, vector<8x8xbf16>, vector<256x8xf32> -> vector<256x8xf32>
    %c0_5 = arith.constant 0 : index
    %c0_6 = arith.constant 0 : index
    %6 = vector.load %arg3[%c0_5, %c0_6] : memref<1x8xf32, #tpu.memory_space<vmem>>, vector<1x8xf32>
    %7 = vector.broadcast %6 : vector<1x8xf32> to vector<256x8xf32>
    %8 = arith.mulf %5, %7 : vector<256x8xf32>
    %c0_7 = arith.constant 0 : index
    %c0_8 = arith.constant 0 : index
    %9 = vector.load %arg4[%c0_7, %c0_8] : memref<1x8xf32, #tpu.memory_space<vmem>>, vector<1x8xf32>
    %10 = vector.broadcast %9 : vector<1x8xf32> to vector<256x8xf32>
    %11 = arith.addf %8, %10 : vector<256x8xf32>
    %cst_9 = arith.constant 0.000000e+00 : f32
    %12 = vector.broadcast %cst_9 : f32 to vector<256x8xf32>
    %13 = arith.maximumf %11, %12 : vector<256x8xf32>
    %cst_10 = arith.constant 0.000000e+00 : f32
    %14 = vector.broadcast %cst_10 : f32 to vector<1x18x8xf32>
    %c0_11 = arith.constant 0 : index
    %c0_12 = arith.constant 0 : index
    %c0_13 = arith.constant 0 : index
    %15 = vector.load %arg12[%c0_11, %c0_12, %c0_13] : memref<18x18x8xf32, #tpu.memory_space<vmem>>, vector<1x18x8xf32>
    tpu.vector_store %arg12[%c0_11, %c0_12, %c0_13], %14 {strides = array<i32>} : memref<18x18x8xf32, #tpu.memory_space<vmem>>, vector<1x18x8xf32>,
    %c17 = arith.constant 17 : index
    %c0_14 = arith.constant 0 : index
    %c0_15 = arith.constant 0 : index
    %16 = vector.load %arg12[%c17, %c0_14, %c0_15] : memref<18x18x8xf32, #tpu.memory_space<vmem>>, vector<1x18x8xf32>
    tpu.vector_store %arg12[%c17, %c0_14, %c0_15], %14 {strides = array<i32>} : memref<18x18x8xf32, #tpu.memory_space<vmem>>, vector<1x18x8xf32>,
    %cst_16 = arith.constant 0.000000e+00 : f32
    %17 = vector.broadcast %cst_16 : f32 to vector<18x1x8xf32>
    %c0_17 = arith.constant 0 : index
    %c0_18 = arith.constant 0 : index
    %c0_19 = arith.constant 0 : index
    %18 = vector.load %arg12[%c0_17, %c0_18, %c0_19] : memref<18x18x8xf32, #tpu.memory_space<vmem>>, vector<18x1x8xf32>
    tpu.vector_store %arg12[%c0_17, %c0_18, %c0_19], %17 {strides = array<i32>} : memref<18x18x8xf32, #tpu.memory_space<vmem>>, vector<18x1x8xf32>,
    %c0_20 = arith.constant 0 : index
    %c17_21 = arith.constant 17 : index
    %c0_22 = arith.constant 0 : index
    %19 = vector.load %arg12[%c0_20, %c17_21, %c0_22] : memref<18x18x8xf32, #tpu.memory_space<vmem>>, vector<18x1x8xf32>
    tpu.vector_store %arg12[%c0_20, %c17_21, %c0_22], %17 {strides = array<i32>} : memref<18x18x8xf32, #tpu.memory_space<vmem>>, vector<18x1x8xf32>,
    %20 = vector.shape_cast %13 : vector<256x8xf32> to vector<16x16x8xf32>
    %c1 = arith.constant 1 : index
    %c1_23 = arith.constant 1 : index
    %c0_24 = arith.constant 0 : index
    %21 = vector.load %arg12[%c1, %c1_23, %c0_24] : memref<18x18x8xf32, #tpu.memory_space<vmem>>, vector<16x16x8xf32>
    tpu.vector_store %arg12[%c1, %c1_23, %c0_24], %20 {strides = array<i32>} : memref<18x18x8xf32, #tpu.memory_space<vmem>>, vector<16x16x8xf32>,
    %cst_25 = arith.constant 0.000000e+00 : f32
    %22 = vector.broadcast %cst_25 : f32 to vector<16x16x8xf32>
    %c0_26 = arith.constant 0 : index
    %c0_27 = arith.constant 0 : index
    %c0_28 = arith.constant 0 : index
    %23 = vector.load %arg12[%c0_26, %c0_27, %c0_28] : memref<18x18x8xf32, #tpu.memory_space<vmem>>, vector<16x16x8xf32>
    %c0_29 = arith.constant 0 : index
    %c0_30 = arith.constant 0 : index
    %c0_31 = arith.constant 0 : index
    %c0_32 = arith.constant 0 : index
    %24 = vector.load %arg5[%c0_29, %c0_30, %c0_31, %c0_32] : memref<9x1x1x8xf32, #tpu.memory_space<vmem>>, vector<1x1x1x8xf32>
    %25 = vector.shape_cast %24 : vector<1x1x1x8xf32> to vector<1x1x8xf32>
    %26 = vector.broadcast %25 : vector<1x1x8xf32> to vector<16x16x8xf32>
    %27 = arith.mulf %23, %26 : vector<16x16x8xf32>
    %28 = arith.addf %22, %27 : vector<16x16x8xf32>
    %c0_33 = arith.constant 0 : index
    %c1_34 = arith.constant 1 : index
    %c0_35 = arith.constant 0 : index
    %29 = vector.load %arg12[%c0_33, %c1_34, %c0_35] : memref<18x18x8xf32, #tpu.memory_space<vmem>>, vector<16x16x8xf32>
    %c1_36 = arith.constant 1 : index
    %c0_37 = arith.constant 0 : index
    %c0_38 = arith.constant 0 : index
    %c0_39 = arith.constant 0 : index
    %30 = vector.load %arg5[%c1_36, %c0_37, %c0_38, %c0_39] : memref<9x1x1x8xf32, #tpu.memory_space<vmem>>, vector<1x1x1x8xf32>
    %31 = vector.shape_cast %30 : vector<1x1x1x8xf32> to vector<1x1x8xf32>
    %32 = vector.broadcast %31 : vector<1x1x8xf32> to vector<16x16x8xf32>
    %33 = arith.mulf %29, %32 : vector<16x16x8xf32>
    %34 = arith.addf %28, %33 : vector<16x16x8xf32>
    %c0_40 = arith.constant 0 : index
    %c2 = arith.constant 2 : index
    %c0_41 = arith.constant 0 : index
    %35 = vector.load %arg12[%c0_40, %c2, %c0_41] : memref<18x18x8xf32, #tpu.memory_space<vmem>>, vector<16x16x8xf32>
    %c2_42 = arith.constant 2 : index
    %c0_43 = arith.constant 0 : index
    %c0_44 = arith.constant 0 : index
    %c0_45 = arith.constant 0 : index
    %36 = vector.load %arg5[%c2_42, %c0_43, %c0_44, %c0_45] : memref<9x1x1x8xf32, #tpu.memory_space<vmem>>, vector<1x1x1x8xf32>
    %37 = vector.shape_cast %36 : vector<1x1x1x8xf32> to vector<1x1x8xf32>
    %38 = vector.broadcast %37 : vector<1x1x8xf32> to vector<16x16x8xf32>
    %39 = arith.mulf %35, %38 : vector<16x16x8xf32>
    %40 = arith.addf %34, %39 : vector<16x16x8xf32>
    %c1_46 = arith.constant 1 : index
    %c0_47 = arith.constant 0 : index
    %c0_48 = arith.constant 0 : index
    %41 = vector.load %arg12[%c1_46, %c0_47, %c0_48] : memref<18x18x8xf32, #tpu.memory_space<vmem>>, vector<16x16x8xf32>
    %c3 = arith.constant 3 : index
    %c0_49 = arith.constant 0 : index
    %c0_50 = arith.constant 0 : index
    %c0_51 = arith.constant 0 : index
    %42 = vector.load %arg5[%c3, %c0_49, %c0_50, %c0_51] : memref<9x1x1x8xf32, #tpu.memory_space<vmem>>, vector<1x1x1x8xf32>
    %43 = vector.shape_cast %42 : vector<1x1x1x8xf32> to vector<1x1x8xf32>
    %44 = vector.broadcast %43 : vector<1x1x8xf32> to vector<16x16x8xf32>
    %45 = arith.mulf %41, %44 : vector<16x16x8xf32>
    %46 = arith.addf %40, %45 : vector<16x16x8xf32>
    %c1_52 = arith.constant 1 : index
    %c1_53 = arith.constant 1 : index
    %c0_54 = arith.constant 0 : index
    %47 = vector.load %arg12[%c1_52, %c1_53, %c0_54] : memref<18x18x8xf32, #tpu.memory_space<vmem>>, vector<16x16x8xf32>
    %c4 = arith.constant 4 : index
    %c0_55 = arith.constant 0 : index
    %c0_56 = arith.constant 0 : index
    %c0_57 = arith.constant 0 : index
    %48 = vector.load %arg5[%c4, %c0_55, %c0_56, %c0_57] : memref<9x1x1x8xf32, #tpu.memory_space<vmem>>, vector<1x1x1x8xf32>
    %49 = vector.shape_cast %48 : vector<1x1x1x8xf32> to vector<1x1x8xf32>
    %50 = vector.broadcast %49 : vector<1x1x8xf32> to vector<16x16x8xf32>
    %51 = arith.mulf %47, %50 : vector<16x16x8xf32>
    %52 = arith.addf %46, %51 : vector<16x16x8xf32>
    %c1_58 = arith.constant 1 : index
    %c2_59 = arith.constant 2 : index
    %c0_60 = arith.constant 0 : index
    %53 = vector.load %arg12[%c1_58, %c2_59, %c0_60] : memref<18x18x8xf32, #tpu.memory_space<vmem>>, vector<16x16x8xf32>
    %c5 = arith.constant 5 : index
    %c0_61 = arith.constant 0 : index
    %c0_62 = arith.constant 0 : index
    %c0_63 = arith.constant 0 : index
    %54 = vector.load %arg5[%c5, %c0_61, %c0_62, %c0_63] : memref<9x1x1x8xf32, #tpu.memory_space<vmem>>, vector<1x1x1x8xf32>
    %55 = vector.shape_cast %54 : vector<1x1x1x8xf32> to vector<1x1x8xf32>
    %56 = vector.broadcast %55 : vector<1x1x8xf32> to vector<16x16x8xf32>
    %57 = arith.mulf %53, %56 : vector<16x16x8xf32>
    %58 = arith.addf %52, %57 : vector<16x16x8xf32>
    %c2_64 = arith.constant 2 : index
    %c0_65 = arith.constant 0 : index
    %c0_66 = arith.constant 0 : index
    %59 = vector.load %arg12[%c2_64, %c0_65, %c0_66] : memref<18x18x8xf32, #tpu.memory_space<vmem>>, vector<16x16x8xf32>
    %c6 = arith.constant 6 : index
    %c0_67 = arith.constant 0 : index
    %c0_68 = arith.constant 0 : index
    %c0_69 = arith.constant 0 : index
    %60 = vector.load %arg5[%c6, %c0_67, %c0_68, %c0_69] : memref<9x1x1x8xf32, #tpu.memory_space<vmem>>, vector<1x1x1x8xf32>
    %61 = vector.shape_cast %60 : vector<1x1x1x8xf32> to vector<1x1x8xf32>
    %62 = vector.broadcast %61 : vector<1x1x8xf32> to vector<16x16x8xf32>
    %63 = arith.mulf %59, %62 : vector<16x16x8xf32>
    %64 = arith.addf %58, %63 : vector<16x16x8xf32>
    %c2_70 = arith.constant 2 : index
    %c1_71 = arith.constant 1 : index
    %c0_72 = arith.constant 0 : index
    %65 = vector.load %arg12[%c2_70, %c1_71, %c0_72] : memref<18x18x8xf32, #tpu.memory_space<vmem>>, vector<16x16x8xf32>
    %c7 = arith.constant 7 : index
    %c0_73 = arith.constant 0 : index
    %c0_74 = arith.constant 0 : index
    %c0_75 = arith.constant 0 : index
    %66 = vector.load %arg5[%c7, %c0_73, %c0_74, %c0_75] : memref<9x1x1x8xf32, #tpu.memory_space<vmem>>, vector<1x1x1x8xf32>
    %67 = vector.shape_cast %66 : vector<1x1x1x8xf32> to vector<1x1x8xf32>
    %68 = vector.broadcast %67 : vector<1x1x8xf32> to vector<16x16x8xf32>
    %69 = arith.mulf %65, %68 : vector<16x16x8xf32>
    %70 = arith.addf %64, %69 : vector<16x16x8xf32>
    %c2_76 = arith.constant 2 : index
    %c2_77 = arith.constant 2 : index
    %c0_78 = arith.constant 0 : index
    %71 = vector.load %arg12[%c2_76, %c2_77, %c0_78] : memref<18x18x8xf32, #tpu.memory_space<vmem>>, vector<16x16x8xf32>
    %c8 = arith.constant 8 : index
    %c0_79 = arith.constant 0 : index
    %c0_80 = arith.constant 0 : index
    %c0_81 = arith.constant 0 : index
    %72 = vector.load %arg5[%c8, %c0_79, %c0_80, %c0_81] : memref<9x1x1x8xf32, #tpu.memory_space<vmem>>, vector<1x1x1x8xf32>
    %73 = vector.shape_cast %72 : vector<1x1x1x8xf32> to vector<1x1x8xf32>
    %74 = vector.broadcast %73 : vector<1x1x8xf32> to vector<16x16x8xf32>
    %75 = arith.mulf %71, %74 : vector<16x16x8xf32>
    %76 = arith.addf %70, %75 : vector<16x16x8xf32>
    %c0_82 = arith.constant 0 : index
    %c0_83 = arith.constant 0 : index
    %c0_84 = arith.constant 0 : index
    %77 = vector.load %arg6[%c0_82, %c0_83, %c0_84] : memref<1x1x8xf32, #tpu.memory_space<vmem>>, vector<1x1x8xf32>
    %78 = vector.broadcast %77 : vector<1x1x8xf32> to vector<16x16x8xf32>
    %79 = arith.mulf %76, %78 : vector<16x16x8xf32>
    %c0_85 = arith.constant 0 : index
    %c0_86 = arith.constant 0 : index
    %c0_87 = arith.constant 0 : index
    %80 = vector.load %arg7[%c0_85, %c0_86, %c0_87] : memref<1x1x8xf32, #tpu.memory_space<vmem>>, vector<1x1x8xf32>
    %81 = vector.broadcast %80 : vector<1x1x8xf32> to vector<16x16x8xf32>
    %82 = arith.addf %79, %81 : vector<16x16x8xf32>
    %83 = vector.shape_cast %82 : vector<16x16x8xf32> to vector<256x8xf32>
    %84 = arith.truncf %83 : vector<256x8xf32> to vector<256x8xbf16>
    %c0_88 = arith.constant 0 : index
    %c0_89 = arith.constant 0 : index
    %85 = vector.load %arg8[%c0_88, %c0_89] : memref<8x8xbf16, #tpu.memory_space<vmem>>, vector<8x8xbf16>
    %cst_90 = arith.constant dense<0.000000e+00> : vector<256x8xf32>
    %86 = tpu.matmul %84, %85, %cst_90 {dimension_numbers = #tpu.dot_dimension_numbers<[1], [0], [0], [1], [0, 0, 1, 1], [], []>} : vector<256x8xbf16>, vector<8x8xbf16>, vector<256x8xf32> -> vector<256x8xf32>
    %c0_91 = arith.constant 0 : index
    %c0_92 = arith.constant 0 : index
    %87 = vector.load %arg9[%c0_91, %c0_92] : memref<1x8xf32, #tpu.memory_space<vmem>>, vector<1x8xf32>
    %88 = vector.broadcast %87 : vector<1x8xf32> to vector<256x8xf32>
    %89 = arith.mulf %86, %88 : vector<256x8xf32>
    %c0_93 = arith.constant 0 : index
    %c0_94 = arith.constant 0 : index
    %90 = vector.load %arg10[%c0_93, %c0_94] : memref<1x8xf32, #tpu.memory_space<vmem>>, vector<1x8xf32>
    %91 = vector.broadcast %90 : vector<1x8xf32> to vector<256x8xf32>
    %92 = arith.addf %89, %91 : vector<256x8xf32>
    %93 = arith.addf %92, %2 : vector<256x8xf32>
    %cst_95 = arith.constant 0.000000e+00 : f32
    %94 = vector.broadcast %cst_95 : f32 to vector<256x8xf32>
    %95 = arith.maximumf %93, %94 : vector<256x8xf32>
    %c0_96 = arith.constant 0 : index
    %c0_97 = arith.constant 0 : index
    %c0_98 = arith.constant 0 : index
    %96 = vector.load %arg11[%c0_96, %c0_97, %c0_98] : memref<1x256x8xf32, #tpu.memory_space<vmem>>, vector<1x256x8xf32>
    %97 = vector.shape_cast %96 : vector<1x256x8xf32> to vector<256x8xf32>
    %98 = vector.shape_cast %95 : vector<256x8xf32> to vector<1x256x8xf32>
    tpu.vector_store %arg11[%c0_96, %c0_97, %c0_98], %98 {strides = array<i32>} : memref<1x256x8xf32, #tpu.memory_space<vmem>>, vector<1x256x8xf32>,
    return
  }
  func.func @transform_0(%arg0: i32) -> (i32, i32, i32, i32) {
    %c0_i32 = arith.constant 0 : i32
    %c0_i32_0 = arith.constant 0 : i32
    %c0_i32_1 = arith.constant 0 : i32
    %c0_i32_2 = arith.constant 0 : i32
    return %arg0, %c0_i32, %c0_i32_0, %c0_i32_1 : i32, i32, i32, i32
  }
  func.func @transform_1(%arg0: i32) -> (i32, i32) {
    %c0_i32 = arith.constant 0 : i32
    %c0_i32_0 = arith.constant 0 : i32
    %c0_i32_1 = arith.constant 0 : i32
    return %c0_i32, %c0_i32_0 : i32, i32
  }
  func.func @transform_2(%arg0: i32) -> (i32, i32) {
    %c0_i32 = arith.constant 0 : i32
    %c0_i32_0 = arith.constant 0 : i32
    %c0_i32_1 = arith.constant 0 : i32
    return %c0_i32, %c0_i32_0 : i32, i32
  }
  func.func @transform_3(%arg0: i32) -> (i32, i32) {
    %c0_i32 = arith.constant 0 : i32
    %c0_i32_0 = arith.constant 0 : i32
    %c0_i32_1 = arith.constant 0 : i32
    return %c0_i32, %c0_i32_0 : i32, i32
  }
  func.func @transform_4(%arg0: i32) -> (i32, i32, i32, i32) {
    %c0_i32 = arith.constant 0 : i32
    %c0_i32_0 = arith.constant 0 : i32
    %c0_i32_1 = arith.constant 0 : i32
    %c0_i32_2 = arith.constant 0 : i32
    %c0_i32_3 = arith.constant 0 : i32
    return %c0_i32, %c0_i32_0, %c0_i32_1, %c0_i32_2 : i32, i32, i32, i32
  }
  func.func @transform_5(%arg0: i32) -> (i32, i32, i32) {
    %c0_i32 = arith.constant 0 : i32
    %c0_i32_0 = arith.constant 0 : i32
    %c0_i32_1 = arith.constant 0 : i32
    %c0_i32_2 = arith.constant 0 : i32
    return %c0_i32, %c0_i32_0, %c0_i32_1 : i32, i32, i32
  }
  func.func @transform_6(%arg0: i32) -> (i32, i32, i32) {
    %c0_i32 = arith.constant 0 : i32
    %c0_i32_0 = arith.constant 0 : i32
    %c0_i32_1 = arith.constant 0 : i32
    %c0_i32_2 = arith.constant 0 : i32
    return %c0_i32, %c0_i32_0, %c0_i32_1 : i32, i32, i32
  }
  func.func @transform_7(%arg0: i32) -> (i32, i32) {
    %c0_i32 = arith.constant 0 : i32
    %c0_i32_0 = arith.constant 0 : i32
    %c0_i32_1 = arith.constant 0 : i32
    return %c0_i32, %c0_i32_0 : i32, i32
  }
  func.func @transform_8(%arg0: i32) -> (i32, i32) {
    %c0_i32 = arith.constant 0 : i32
    %c0_i32_0 = arith.constant 0 : i32
    %c0_i32_1 = arith.constant 0 : i32
    return %c0_i32, %c0_i32_0 : i32, i32
  }
  func.func @transform_9(%arg0: i32) -> (i32, i32) {
    %c0_i32 = arith.constant 0 : i32
    %c0_i32_0 = arith.constant 0 : i32
    %c0_i32_1 = arith.constant 0 : i32
    return %c0_i32, %c0_i32_0 : i32, i32
  }
  func.func @transform_10(%arg0: i32) -> (i32, i32, i32) {
    %c0_i32 = arith.constant 0 : i32
    %c0_i32_0 = arith.constant 0 : i32
    %c0_i32_1 = arith.constant 0 : i32
    return %arg0, %c0_i32, %c0_i32_0 : i32, i32, i32
  }
}

</mosaic_0001>

<llo_original>
// kernel: tpu_custom_call.1
$region0: #{tpu_custom_call.1}
  #allocation0 [shape = 'u32[]', space=smem, size = 0x4, offset = 0x4, fixed_abs, tag = 'smem constant byte address 0x4 - core index']
  #allocation1 [shape = 'u32[144,128]{1,0:T(1,128)}', space=vmem, size = 0x12000, scoped, tag = 'internal scratch']
  #allocation2 [shape = 'f32[18,18,8]{2,1,0:T(8,128)}', space=vmem, size = 0x36000, scoped, tag = 'scratch operand']
  %s0 = inlined_call_operand.vmem [shape: f32[2,16,16,8], index: 0, kind: input, shape index: {}]
  %s1 = inlined_call_operand.vmem [shape: bf16[8,8], index: 1, kind: input, shape index: {}]
  %s2 = inlined_call_operand.vmem [shape: f32[1,8], index: 2, kind: input, shape index: {}]
  %s3 = inlined_call_operand.vmem [shape: f32[1,8], index: 3, kind: input, shape index: {}]
  %s4 = inlined_call_operand.vmem [shape: f32[9,1,1,8], index: 4, kind: input, shape index: {}]
  %s5 = inlined_call_operand.vmem [shape: f32[1,1,8], index: 5, kind: input, shape index: {}]
  %s6 = inlined_call_operand.vmem [shape: f32[1,1,8], index: 6, kind: input, shape index: {}]
  %s7 = inlined_call_operand.vmem [shape: bf16[8,8], index: 7, kind: input, shape index: {}]
  %s8 = inlined_call_operand.vmem [shape: f32[1,8], index: 8, kind: input, shape index: {}]
  %s9 = inlined_call_operand.vmem [shape: f32[1,8], index: 9, kind: input, shape index: {}]
  %s10 = inlined_call_operand.vmem [shape: f32[2,256,8], index: 10, kind: output, shape index: {}]
  %s11 = sld [smem:[#allocation0]]
  $region73: #{tpu_custom_call.1} parent=0
    _
  %s13 = ssub.s32 1, %s11
  %s14 = scalar_select 0, %s13, %s11
  loop: start=0, step=1, limit=4
  $region2: #{tpu_custom_call.1} parent=0 // loop_pre_header
    _
  $region3: #{tpu_custom_call.1} parent=0 // loop_header
    %s16 = sphi 0, %s20
    %p17 = scmp.ge.s32.totalorder %s16, 4
    %s26 = sphi 0, %s28
    %s29 = sphi 0, %s26
    %s30 = sphi 0, %s29
    %s46 = sphi 0, %s30
    %s50 = sphi 0, %s50
    %s52 = sphi 0, %s50
    %s53 = sphi 0, %s52
    %s67 = sphi 0, %s53
    %s71 = sphi 0, %s71
    %s73 = sphi 0, %s71
    %s74 = sphi 0, %s73
    %s88 = sphi 0, %s74
    %s92 = sphi 0, %s92
    %s94 = sphi 0, %s92
    %s95 = sphi 0, %s94
    %s109 = sphi 0, %s95
    %s113 = sphi 0, %s113
    %s115 = sphi 0, %s113
    %s116 = sphi 0, %s115
    %s130 = sphi 0, %s116
    %s134 = sphi 0, %s134
    %s136 = sphi 0, %s134
    %s137 = sphi 0, %s136
    %s151 = sphi 0, %s137
    %s155 = sphi 0, %s155
    %s157 = sphi 0, %s155
    %s158 = sphi 0, %s157
    %s172 = sphi 0, %s158
    %s176 = sphi 0, %s176
    %s178 = sphi 0, %s176
    %s179 = sphi 0, %s178
    %s193 = sphi 0, %s179
    %s197 = sphi 0, %s197
    %s199 = sphi 0, %s197
    %s200 = sphi 0, %s199
    %s214 = sphi 0, %s200
    %s218 = sphi 0, %s218
    %s220 = sphi 0, %s218
    %s221 = sphi 0, %s220
    %s235 = sphi 0, %s221
    %s241 = sphi 0, %s243
    %s244 = sphi 0, %s241
    %s245 = sphi 0, %s244
    %s261 = sphi 0, %s245
  $region4: #{tpu_custom_call.1} parent=0 // loop_header_branch
    %19 = sbr.rel (%p17) target = $region8
  $region5: #{tpu_custom_call.1} parent=0 // loop_body
    %s21 = ssub.s32 %s16, 1
    %s22 = ssub.s32 %s16, 2
    %s23 = sadd.s32 %s16, 1
    %s24 = ssub.s32 %s16, %s23
    %p25 = scmp.eq.s32.totalorder %s24, 0
    %s27 = sadd.s32 %s26, 1
    %s28 = scalar_select %p25, %s26, %s27
    %p31 = pneg %p25
    %p32 = scmp.eq.s32.totalorder %s16, 1
    %p33 = por %p31, %p32
    %p34 = scmp.ne.s32.totalorder %s26, %s29
    %p35 = scmp.eq.s32.totalorder %s16, 0
    %p36 = por %p34, %p35
    %p37 = scmp.ne.s32.totalorder %s26, %s29
    %p38 = scmp.eq.s32.totalorder %s21, 1
    %p39 = por %p37, %p38
    %p40 = scmp.ne.s32.totalorder %s29, %s30
    %p41 = scmp.eq.s32.totalorder %s21, 0
    %p42 = por %p40, %p41
    %p43 = scmp.ne.s32.totalorder %s29, %s30
    %p44 = scmp.eq.s32.totalorder %s22, 1
    %p45 = por %p43, %p44
    %p47 = scmp.ne.s32.totalorder %s30, %s46
    %p48 = scmp.eq.s32.totalorder %s22, 0
    %p49 = por %p47, %p48
    %s51 = sadd.s32 %s50, 1
    %p54 = scmp.eq.s32.totalorder %s16, 1
    %p55 = scmp.ne.s32.totalorder %s50, %s52
    %p56 = scmp.eq.s32.totalorder %s16, 0
    %p57 = por %p55, %p56
    %p58 = scmp.ne.s32.totalorder %s50, %s52
    %p59 = scmp.eq.s32.totalorder %s21, 1
    %p60 = por %p58, %p59
    %p61 = scmp.ne.s32.totalorder %s52, %s53
    %p62 = scmp.eq.s32.totalorder %s21, 0
    %p63 = por %p61, %p62
    %p64 = scmp.ne.s32.totalorder %s52, %s53
    %p65 = scmp.eq.s32.totalorder %s22, 1
    %p66 = por %p64, %p65
    %p68 = scmp.ne.s32.totalorder %s53, %s67
    %p69 = scmp.eq.s32.totalorder %s22, 0
    %p70 = por %p68, %p69
    %s72 = sadd.s32 %s71, 1
    %p75 = scmp.eq.s32.totalorder %s16, 1
    %p76 = scmp.ne.s32.totalorder %s71, %s73
    %p77 = scmp.eq.s32.totalorder %s16, 0
    %p78 = por %p76, %p77
    %p79 = scmp.ne.s32.totalorder %s71, %s73
    %p80 = scmp.eq.s32.totalorder %s21, 1
    %p81 = por %p79, %p80
    %p82 = scmp.ne.s32.totalorder %s73, %s74
    %p83 = scmp.eq.s32.totalorder %s21, 0
    %p84 = por %p82, %p83
    %p85 = scmp.ne.s32.totalorder %s73, %s74
    %p86 = scmp.eq.s32.totalorder %s22, 1
    %p87 = por %p85, %p86
    %p89 = scmp.ne.s32.totalorder %s74, %s88
    %p90 = scmp.eq.s32.totalorder %s22, 0
    %p91 = por %p89, %p90
    %s93 = sadd.s32 %s92, 1
    %p96 = scmp.eq.s32.totalorder %s16, 1
    %p97 = scmp.ne.s32.totalorder %s92, %s94
    %p98 = scmp.eq.s32.totalorder %s16, 0
    %p99 = por %p97, %p98
    %p100 = scmp.ne.s32.totalorder %s92, %s94
    %p101 = scmp.eq.s32.totalorder %s21, 1
    %p102 = por %p100, %p101
    %p103 = scmp.ne.s32.totalorder %s94, %s95
    %p104 = scmp.eq.s32.totalorder %s21, 0
    %p105 = por %p103, %p104
    %p106 = scmp.ne.s32.totalorder %s94, %s95
    %p107 = scmp.eq.s32.totalorder %s22, 1
    %p108 = por %p106, %p107
    %p110 = scmp.ne.s32.totalorder %s95, %s109
    %p111 = scmp.eq.s32.totalorder %s22, 0
    %p112 = por %p110, %p111
    %s114 = sadd.s32 %s113, 1
    %p117 = scmp.eq.s32.totalorder %s16, 1
    %p118 = scmp.ne.s32.totalorder %s113, %s115
    %p119 = scmp.eq.s32.totalorder %s16, 0
    %p120 = por %p118, %p119
    %p121 = scmp.ne.s32.totalorder %s113, %s115
    %p122 = scmp.eq.s32.totalorder %s21, 1
    %p123 = por %p121, %p122
    %p124 = scmp.ne.s32.totalorder %s115, %s116
    %p125 = scmp.eq.s32.totalorder %s21, 0
    %p126 = por %p124, %p125
    %p127 = scmp.ne.s32.totalorder %s115, %s116
    %p128 = scmp.eq.s32.totalorder %s22, 1
    %p129 = por %p127, %p128
    %p131 = scmp.ne.s32.totalorder %s116, %s130
    %p132 = scmp.eq.s32.totalorder %s22, 0
    %p133 = por %p131, %p132
    %s135 = sadd.s32 %s134, 1
    %p138 = scmp.eq.s32.totalorder %s16, 1
    %p139 = scmp.ne.s32.totalorder %s134, %s136
    %p140 = scmp.eq.s32.totalorder %s16, 0
    %p141 = por %p139, %p140
    %p142 = scmp.ne.s32.totalorder %s134, %s136
    %p143 = scmp.eq.s32.totalorder %s21, 1
    %p144 = por %p142, %p143
    %p145 = scmp.ne.s32.totalorder %s136, %s137
    %p146 = scmp.eq.s32.totalorder %s21, 0
    %p147 = por %p145, %p146
    %p148 = scmp.ne.s32.totalorder %s136, %s137
    %p149 = scmp.eq.s32.totalorder %s22, 1
    %p150 = por %p148, %p149
    %p152 = scmp.ne.s32.totalorder %s137, %s151
    %p153 = scmp.eq.s32.totalorder %s22, 0
    %p154 = por %p152, %p153
    %s156 = sadd.s32 %s155, 1
    %p159 = scmp.eq.s32.totalorder %s16, 1
    %p160 = scmp.ne.s32.totalorder %s155, %s157
    %p161 = scmp.eq.s32.totalorder %s16, 0
    %p162 = por %p160, %p161
    %p163 = scmp.ne.s32.totalorder %s155, %s157
    %p164 = scmp.eq.s32.totalorder %s21, 1
    %p165 = por %p163, %p164
    %p166 = scmp.ne.s32.totalorder %s157, %s158
    %p167 = scmp.eq.s32.totalorder %s21, 0
    %p168 = por %p166, %p167
    %p169 = scmp.ne.s32.totalorder %s157, %s158
    %p170 = scmp.eq.s32.totalorder %s22, 1
    %p171 = por %p169, %p170
    %p173 = scmp.ne.s32.totalorder %s158, %s172
    %p174 = scmp.eq.s32.totalorder %s22, 0
    %p175 = por %p173, %p174
    %s177 = sadd.s32 %s176, 1
    %p180 = scmp.eq.s32.totalorder %s16, 1
    %p181 = scmp.ne.s32.totalorder %s176, %s178
    %p182 = scmp.eq.s32.totalorder %s16, 0
    %p183 = por %p181, %p182
    %p184 = scmp.ne.s32.totalorder %s176, %s178
    %p185 = scmp.eq.s32.totalorder %s21, 1
    %p186 = por %p184, %p185
    %p187 = scmp.ne.s32.totalorder %s178, %s179
    %p188 = scmp.eq.s32.totalorder %s21, 0
    %p189 = por %p187, %p188
    %p190 = scmp.ne.s32.totalorder %s178, %s179
    %p191 = scmp.eq.s32.totalorder %s22, 1
    %p192 = por %p190, %p191
    %p194 = scmp.ne.s32.totalorder %s179, %s193
    %p195 = scmp.eq.s32.totalorder %s22, 0
    %p196 = por %p194, %p195
    %s198 = sadd.s32 %s197, 1
    %p201 = scmp.eq.s32.totalorder %s16, 1
    %p202 = scmp.ne.s32.totalorder %s197, %s199
    %p203 = scmp.eq.s32.totalorder %s16, 0
    %p204 = por %p202, %p203
    %p205 = scmp.ne.s32.totalorder %s197, %s199
    %p206 = scmp.eq.s32.totalorder %s21, 1
    %p207 = por %p205, %p206
    %p208 = scmp.ne.s32.totalorder %s199, %s200
    %p209 = scmp.eq.s32.totalorder %s21, 0
    %p210 = por %p208, %p209
    %p211 = scmp.ne.s32.totalorder %s199, %s200
    %p212 = scmp.eq.s32.totalorder %s22, 1
    %p213 = por %p211, %p212
    %p215 = scmp.ne.s32.totalorder %s200, %s214
    %p216 = scmp.eq.s32.totalorder %s22, 0
    %p217 = por %p215, %p216
    %s219 = sadd.s32 %s218, 1
    %p222 = scmp.eq.s32.totalorder %s16, 1
    %p223 = scmp.ne.s32.totalorder %s218, %s220
    %p224 = scmp.eq.s32.totalorder %s16, 0
    %p225 = por %p223, %p224
    %p226 = scmp.ne.s32.totalorder %s218, %s220
    %p227 = scmp.eq.s32.totalorder %s21, 1
    %p228 = por %p226, %p227
    %p229 = scmp.ne.s32.totalorder %s220, %s221
    %p230 = scmp.eq.s32.totalorder %s21, 0
    %p231 = por %p229, %p230
    %p232 = scmp.ne.s32.totalorder %s220, %s221
    %p233 = scmp.eq.s32.totalorder %s22, 1
    %p234 = por %p232, %p233
    %p236 = scmp.ne.s32.totalorder %s221, %s235
    %p237 = scmp.eq.s32.totalorder %s22, 0
    %p238 = por %p236, %p237
    %s239 = ssub.s32 %s16, %s23
    %p240 = scmp.eq.s32.totalorder %s239, 0
    %s242 = sadd.s32 %s241, 1
    %s243 = scalar_select %p240, %s241, %s242
    %p246 = pneg %p240
    %p247 = scmp.eq.s32.totalorder %s16, 1
    %p248 = por %p246, %p247
    %p249 = scmp.ne.s32.totalorder %s241, %s244
    %p250 = scmp.eq.s32.totalorder %s16, 0
    %p251 = por %p249, %p250
    %p252 = scmp.ne.s32.totalorder %s241, %s244
    %p253 = scmp.eq.s32.totalorder %s21, 1
    %p254 = por %p252, %p253
    %p255 = scmp.ne.s32.totalorder %s244, %s245
    %p256 = scmp.eq.s32.totalorder %s21, 0
    %p257 = por %p255, %p256
    %p258 = scmp.ne.s32.totalorder %s244, %s245
    %p259 = scmp.eq.s32.totalorder %s22, 1
    %p260 = por %p258, %p259
    %p262 = scmp.ne.s32.totalorder %s245, %s261
    %p263 = scmp.eq.s32.totalorder %s22, 0
    %p264 = por %p262, %p263
    %p265 = scmp.le.s32.totalorder 1, %s16
    %p266 = scmp.lt.s32.totalorder %s16, 3
    %p267 = pnand %p265, %p266
    %p268 = pneg %p267
    // Predicated region
    $region9: #{tpu_custom_call.1} parent=5 // pred_check
      _
    $region10: #{tpu_custom_call.1} parent=5 // pred_check_branch
      %270 = sbr.rel (%p267) target = $region12
    $region11: #{tpu_custom_call.1} parent=5 // pred_region
      %s271 = ssub.s32 %s16, 1
      // Predicated region
      $region13: #{tpu_custom_call.1} parent=11 // pred_check
        %p272 = pneg %p63
      $region14: #{tpu_custom_call.1} parent=11 // pred_check_branch
        %274 = sbr.rel (%p272) target = $region16
      $region15: #{tpu_custom_call.1} parent=11 // pred_region
        _
      $region16: #{tpu_custom_call.1} parent=11 // pred_fallthru
        _
      // Predicated region
      $region17: #{tpu_custom_call.1} parent=11 // pred_check
        %p275 = pneg %p84
      $region18: #{tpu_custom_call.1} parent=11 // pred_check_branch
        %277 = sbr.rel (%p275) target = $region20
      $region19: #{tpu_custom_call.1} parent=11 // pred_region
        _
      $region20: #{tpu_custom_call.1} parent=11 // pred_fallthru
        _
      // Predicated region
      $region21: #{tpu_custom_call.1} parent=11 // pred_check
        %p278 = pneg %p105
      $region22: #{tpu_custom_call.1} parent=11 // pred_check_branch
        %280 = sbr.rel (%p278) target = $region24
      $region23: #{tpu_custom_call.1} parent=11 // pred_region
        _
      $region24: #{tpu_custom_call.1} parent=11 // pred_fallthru
        _
      // Predicated region
      $region25: #{tpu_custom_call.1} parent=11 // pred_check
        %p281 = pneg %p126
      $region26: #{tpu_custom_call.1} parent=11 // pred_check_branch
        %283 = sbr.rel (%p281) target = $region28
      $region27: #{tpu_custom_call.1} parent=11 // pred_region
        _
      $region28: #{tpu_custom_call.1} parent=11 // pred_fallthru
        _
      // Predicated region
      $region29: #{tpu_custom_call.1} parent=11 // pred_check
        %p284 = pneg %p147
      $region30: #{tpu_custom_call.1} parent=11 // pred_check_branch
        %286 = sbr.rel (%p284) target = $region32
      $region31: #{tpu_custom_call.1} parent=11 // pred_region
        _
      $region32: #{tpu_custom_call.1} parent=11 // pred_fallthru
        _
      // Predicated region
      $region33: #{tpu_custom_call.1} parent=11 // pred_check
        %p287 = pneg %p168
      $region34: #{tpu_custom_call.1} parent=11 // pred_check_branch
        %289 = sbr.rel (%p287) target = $region36
      $region35: #{tpu_custom_call.1} parent=11 // pred_region
        _
      $region36: #{tpu_custom_call.1} parent=11 // pred_fallthru
        _
      // Predicated region
      $region37: #{tpu_custom_call.1} parent=11 // pred_check
        %p290 = pneg %p189
      $region38: #{tpu_custom_call.1} parent=11 // pred_check_branch
        %292 = sbr.rel (%p290) target = $region40
      $region39: #{tpu_custom_call.1} parent=11 // pred_region
        _
      $region40: #{tpu_custom_call.1} parent=11 // pred_fallthru
        _
      // Predicated region
      $region41: #{tpu_custom_call.1} parent=11 // pred_check
        %p293 = pneg %p210
      $region42: #{tpu_custom_call.1} parent=11 // pred_check_branch
        %295 = sbr.rel (%p293) target = $region44
      $region43: #{tpu_custom_call.1} parent=11 // pred_region
        _
      $region44: #{tpu_custom_call.1} parent=11 // pred_fallthru
        _
      // Predicated region
      $region45: #{tpu_custom_call.1} parent=11 // pred_check
        %p296 = pneg %p231
      $region46: #{tpu_custom_call.1} parent=11 // pred_check_branch
        %298 = sbr.rel (%p296) target = $region48
      $region47: #{tpu_custom_call.1} parent=11 // pred_region
        _
      $region48: #{tpu_custom_call.1} parent=11 // pred_fallthru
        _
    $region12: #{tpu_custom_call.1} parent=5 // pred_fallthru
      _
    %p299 = scmp.lt.s32.totalorder %s16, 2
    // Predicated region
    $region49: #{tpu_custom_call.1} parent=5 // pred_check
      %p300 = pneg %p299
    $region50: #{tpu_custom_call.1} parent=5 // pred_check_branch
      %302 = sbr.rel (%p300) target = $region52
    $region51: #{tpu_custom_call.1} parent=5 // pred_region
      // Predicated region
      $region53: #{tpu_custom_call.1} parent=51 // pred_check
        %p303 = pneg %p36
      $region54: #{tpu_custom_call.1} parent=51 // pred_check_branch
        %305 = sbr.rel (%p303) target = $region56
      $region55: #{tpu_custom_call.1} parent=51 // pred_region
        %p306 = scmp.lt.s32.totalorder %s16, 1
        %s307 = scalar_select %p306, %s16, 1
        %s308 = smul.addr %s307, 32
        %s309 = smul.addr %s308, 8
        %s310 = scalar_lea.vmem %s0, %s309
      $region56: #{tpu_custom_call.1} parent=51 // pred_fallthru
        _
    $region52: #{tpu_custom_call.1} parent=5 // pred_fallthru
      _
    %p311 = scmp.le.s32.totalorder 1, %s16
    %p312 = scmp.lt.s32.totalorder %s16, 3
    %p313 = pnand %p311, %p312
    %p314 = pneg %p313
    // Predicated region
    $region57: #{tpu_custom_call.1} parent=5 // pred_check
      _
    $region58: #{tpu_custom_call.1} parent=5 // pred_check_branch
      %316 = sbr.rel (%p313) target = $region60
    $region59: #{tpu_custom_call.1} parent=5 // pred_region
      %s317 = ssub.s32 %s16, 1
      %p318 = scmp.lt.s32.totalorder %s21, 1
      %s319 = scalar_select %p318, %s21, 1
      %s320 = smul.addr %s319, 32
      %s321 = smul.addr %s320, 8
      %s322 = scalar_lea.vmem %s0, %s321
      %p323 = pneg %p42
      %p324 = pneg %p39
      %p325 = pneg %p63
      %p326 = pneg %p60
      %p327 = pneg %p84
      %p328 = pneg %p81
      %p329 = pneg %p105
      %p330 = pneg %p102
      %p331 = pneg %p126
      %p332 = pneg %p123
      %p333 = pneg %p147
      %p334 = pneg %p144
      %p335 = pneg %p168
      %p336 = pneg %p165
      %p337 = pneg %p189
      %p338 = pneg %p186
      %p339 = pneg %p210
      %p340 = pneg %p207
      %p341 = pneg %p231
      %p342 = pneg %p228
      %p343 = pneg %p257
      %p344 = pneg %p254
      %p345 = scmp.lt.s32.totalorder %s21, 1
      %s346 = scalar_select %p345, %s21, 1
      %s347 = smul.addr %s346, 32
      %s348 = smul.addr %s347, 8
      %s349 = scalar_lea.vmem %s10, %s348
      %p350 = scmp.lt.s32.totalorder %s21, 1
      %s351 = scalar_select %p350, %s21, 1
      %s352 = smul.addr %s351, 32
      %s353 = smul.addr %s352, 8
      %s354 = scalar_lea.vmem %s0, %s353
      %p355 = scmp.lt.s32.totalorder %s21, 1
      %s356 = scalar_select %p355, %s21, 1
      %s357 = smul.addr %s356, 32
      %s358 = smul.addr %s357, 8
      %s359 = scalar_lea.vmem %s10, %s358
      %v361 = vld [vmem:[%s354] sm:$0xff]
      %v362 = vld [vmem:[%s354 + $0x8] sm:$0xff]
      %v363 = vld [vmem:[%s354 + $0x10] sm:$0xff]
      %v364 = vld [vmem:[%s354 + $0x18] sm:$0xff]
      %v365 = vld [vmem:[%s354 + $0x20] sm:$0xff]
      %v366 = vld [vmem:[%s354 + $0x28] sm:$0xff]
      %v367 = vld [vmem:[%s354 + $0x30] sm:$0xff]
      %v368 = vld [vmem:[%s354 + $0x38] sm:$0xff]
      %v369 = vld [vmem:[%s354 + $0x40] sm:$0xff]
      %v370 = vld [vmem:[%s354 + $0x48] sm:$0xff]
      %v371 = vld [vmem:[%s354 + $0x50] sm:$0xff]
      %v372 = vld [vmem:[%s354 + $0x58] sm:$0xff]
      %v373 = vld [vmem:[%s354 + $0x60] sm:$0xff]
      %v374 = vld [vmem:[%s354 + $0x68] sm:$0xff]
      %v375 = vld [vmem:[%s354 + $0x70] sm:$0xff]
      %v376 = vld [vmem:[%s354 + $0x78] sm:$0xff]
      %v377 = vld [vmem:[%s354 + $0x80] sm:$0xff]
      %v378 = vld [vmem:[%s354 + $0x88] sm:$0xff]
      %v379 = vld [vmem:[%s354 + $0x90] sm:$0xff]
      %v380 = vld [vmem:[%s354 + $0x98] sm:$0xff]
      %v381 = vld [vmem:[%s354 + $0xa0] sm:$0xff]
      %v382 = vld [vmem:[%s354 + $0xa8] sm:$0xff]
      %v383 = vld [vmem:[%s354 + $0xb0] sm:$0xff]
      %v384 = vld [vmem:[%s354 + $0xb8] sm:$0xff]
      %v385 = vld [vmem:[%s354 + $0xc0] sm:$0xff]
      %v386 = vld [vmem:[%s354 + $0xc8] sm:$0xff]
      %v387 = vld [vmem:[%s354 + $0xd0] sm:$0xff]
      %v388 = vld [vmem:[%s354 + $0xd8] sm:$0xff]
      %v389 = vld [vmem:[%s354 + $0xe0] sm:$0xff]
      %v390 = vld [vmem:[%s354 + $0xe8] sm:$0xff]
      %v391 = vld [vmem:[%s354 + $0xf0] sm:$0xff]
      %v392 = vld [vmem:[%s354 + $0xf8] sm:$0xff]
      %v393 = vpack.c.bf16 %v362, %v361
      %v394 = vpack.c.bf16 %v364, %v363
      %v395 = vpack.c.bf16 %v366, %v365
      %v396 = vpack.c.bf16 %v368, %v367
      %v397 = vpack.c.bf16 %v370, %v369
      %v398 = vpack.c.bf16 %v372, %v371
      %v399 = vpack.c.bf16 %v374, %v373
      %v400 = vpack.c.bf16 %v376, %v375
      %v401 = vpack.c.bf16 %v378, %v377
      %v402 = vpack.c.bf16 %v380, %v379
      %v403 = vpack.c.bf16 %v382, %v381
      %v404 = vpack.c.bf16 %v384, %v383
      %v405 = vpack.c.bf16 %v386, %v385
      %v406 = vpack.c.bf16 %v388, %v387
      %v407 = vpack.c.bf16 %v390, %v389
      %v408 = vpack.c.bf16 %v392, %v391
      %v409 = vld [vmem:[%s1] sm:$0xf]
      %vm410 = vcmask 64512
      %v412 = vsel %vm410, %v393, 0
      %v415 = vsel %vm410, %v394, 0
      %v418 = vsel %vm410, %v395, 0
      %v421 = vsel %vm410, %v396, 0
      %v424 = vsel %vm410, %v397, 0
      %v427 = vsel %vm410, %v398, 0
      %v430 = vsel %vm410, %v399, 0
      %v433 = vsel %vm410, %v400, 0
      %v436 = vsel %vm410, %v401, 0
      %v439 = vsel %vm410, %v402, 0
      %v442 = vsel %vm410, %v403, 0
      %v445 = vsel %vm410, %v404, 0
      %v448 = vsel %vm410, %v405, 0
      %v451 = vsel %vm410, %v406, 0
      %v454 = vsel %vm410, %v407, 0
      %v457 = vsel %vm410, %v408, 0
      %vm459 = vcmask 1043456
      %v461 = vsel %vm459, %v409, 0
      %463 = vmatprep.subr.bf16.mxu0 0
      %464 = vmatpush1.bf16.msra.mxu0 0
      %465 = vmatprep.subr.bf16.mxu0 0
      %466 = vmatpush1.bf16.msra.mxu0 0
      %467 = vmatprep.subr.bf16.mxu0 0
      %468 = vmatpush1.bf16.msra.mxu0 0
      %469 = vmatprep.subr.bf16.mxu0 0
      %470 = vmatpush1.bf16.msra.mxu0 0
      %471 = vmatprep.subr.bf16.mxu0 0
      %472 = vmatpush1.bf16.msra.mxu0 0
      %473 = vmatprep.subr.bf16.mxu0 0
      %474 = vmatpush1.bf16.msra.mxu0 0
      %475 = vmatprep.subr.bf16.mxu0 0
      %476 = vmatpush1.bf16.msra.mxu0 0
      %477 = vmatprep.subr.bf16.mxu0 0
      %478 = vmatpush1.bf16.msra.mxu0 %v461
      %479 = vmatprep.subr.bf16.mxu0 0
      %480 = vmatpush2.bf16.msra.mxu0 0
      %481 = vmatprep.subr.bf16.mxu0 0
      %482 = vmatpush2.bf16.msra.mxu0 0
      %483 = vmatprep.subr.bf16.mxu0 0
      %484 = vmatpush2.bf16.msra.mxu0 0
      %485 = vmatprep.subr.bf16.mxu0 0
      %486 = vmatpush2.bf16.msra.mxu0 0
      %487 = vmatprep.subr.bf16.mxu0 0
      %488 = vmatpush2.bf16.msra.mxu0 0
      %489 = vmatprep.subr.bf16.mxu0 0
      %490 = vmatpush2.bf16.msra.mxu0 0
      %491 = vmatprep.subr.bf16.mxu0 0
      %492 = vmatpush2.bf16.msra.mxu0 0
      %493 = vmatprep.subr.bf16.mxu0 0
      %494 = vmatpush2.bf16.msra.mxu0 0
      %495 = vmatprep.mubr.bf16.mxu0 0
      %496 = vmatmul.mubr.bf16.gmra.mxu0 %v412
      %v497 = vpop.f32.mrf.mxu0
      %v498 = vadd.f32 0.0, %v497
      %v499 = vpop.f32.mrf.mxu0
      %v500 = vpop.f32.mrf.mxu0
      %v501 = vadd.f32 0.0, %v500
      %v502 = vpop.f32.mrf.mxu0
      %503 = vmatprep.mubr.bf16.mxu0 0
      %504 = vmatmul.mubr.bf16.gmra.mxu0 %v415
      %v505 = vpop.f32.mrf.mxu0
      %v506 = vadd.f32 0.0, %v505
      %v507 = vpop.f32.mrf.mxu0
      %v508 = vpop.f32.mrf.mxu0
      %v509 = vadd.f32 0.0, %v508
      %v510 = vpop.f32.mrf.mxu0
      %511 = vmatprep.mubr.bf16.mxu0 0
      %512 = vmatmul.mubr.bf16.gmra.mxu0 %v418
      %v513 = vpop.f32.mrf.mxu0
      %v514 = vadd.f32 0.0, %v513
      %v515 = vpop.f32.mrf.mxu0
      %v516 = vpop.f32.mrf.mxu0
      %v517 = vadd.f32 0.0, %v516
      %v518 = vpop.f32.mrf.mxu0
      %519 = vmatprep.mubr.bf16.mxu0 0
      %520 = vmatmul.mubr.bf16.gmra.mxu0 %v421
      %v521 = vpop.f32.mrf.mxu0
      %v522 = vadd.f32 0.0, %v521
      %v523 = vpop.f32.mrf.mxu0
      %v524 = vpop.f32.mrf.mxu0
      %v525 = vadd.f32 0.0, %v524
      %v526 = vpop.f32.mrf.mxu0
      %527 = vmatprep.mubr.bf16.mxu0 0
      %528 = vmatmul.mubr.bf16.gmra.mxu0 %v424
      %v529 = vpop.f32.mrf.mxu0
      %v530 = vadd.f32 0.0, %v529
      %v531 = vpop.f32.mrf.mxu0
      %v532 = vpop.f32.mrf.mxu0
      %v533 = vadd.f32 0.0, %v532
      %v534 = vpop.f32.mrf.mxu0
      %535 = vmatprep.mubr.bf16.mxu0 0
      %536 = vmatmul.mubr.bf16.gmra.mxu0 %v427
      %v537 = vpop.f32.mrf.mxu0
      %v538 = vadd.f32 0.0, %v537
      %v539 = vpop.f32.mrf.mxu0
      %v540 = vpop.f32.mrf.mxu0
      %v541 = vadd.f32 0.0, %v540
      %v542 = vpop.f32.mrf.mxu0
      %543 = vmatprep.mubr.bf16.mxu0 0
      %544 = vmatmul.mubr.bf16.gmra.mxu0 %v430
      %v545 = vpop.f32.mrf.mxu0
      %v546 = vadd.f32 0.0, %v545
      %v547 = vpop.f32.mrf.mxu0
      %v548 = vpop.f32.mrf.mxu0
      %v549 = vadd.f32 0.0, %v548
      %v550 = vpop.f32.mrf.mxu0
      %551 = vmatprep.mubr.bf16.mxu0 0
      %552 = vmatmul.mubr.bf16.gmra.mxu0 %v433
      %v553 = vpop.f32.mrf.mxu0
      %v554 = vadd.f32 0.0, %v553
      %v555 = vpop.f32.mrf.mxu0
      %v556 = vpop.f32.mrf.mxu0
      %v557 = vadd.f32 0.0, %v556
      %v558 = vpop.f32.mrf.mxu0
      %559 = vmatprep.mubr.bf16.mxu0 0
      %560 = vmatmul.mubr.bf16.gmra.mxu0 %v436
      %v561 = vpop.f32.mrf.mxu0
      %v562 = vadd.f32 0.0, %v561
      %v563 = vpop.f32.mrf.mxu0
      %v564 = vpop.f32.mrf.mxu0
      %v565 = vadd.f32 0.0, %v564
      %v566 = vpop.f32.mrf.mxu0
      %567 = vmatprep.mubr.bf16.mxu0 0
      %568 = vmatmul.mubr.bf16.gmra.mxu0 %v439
      %v569 = vpop.f32.mrf.mxu0
      %v570 = vadd.f32 0.0, %v569
      %v571 = vpop.f32.mrf.mxu0
      %v572 = vpop.f32.mrf.mxu0
      %v573 = vadd.f32 0.0, %v572
      %v574 = vpop.f32.mrf.mxu0
      %575 = vmatprep.mubr.bf16.mxu0 0
      %576 = vmatmul.mubr.bf16.gmra.mxu0 %v442
      %v577 = vpop.f32.mrf.mxu0
      %v578 = vadd.f32 0.0, %v577
      %v579 = vpop.f32.mrf.mxu0
      %v580 = vpop.f32.mrf.mxu0
      %v581 = vadd.f32 0.0, %v580
      %v582 = vpop.f32.mrf.mxu0
      %583 = vmatprep.mubr.bf16.mxu0 0
      %584 = vmatmul.mubr.bf16.gmra.mxu0 %v445
      %v585 = vpop.f32.mrf.mxu0
      %v586 = vadd.f32 0.0, %v585
      %v587 = vpop.f32.mrf.mxu0
      %v588 = vpop.f32.mrf.mxu0
      %v589 = vadd.f32 0.0, %v588
      %v590 = vpop.f32.mrf.mxu0
      %591 = vmatprep.mubr.bf16.mxu0 0
      %592 = vmatmul.mubr.bf16.gmra.mxu0 %v448
      %v593 = vpop.f32.mrf.mxu0
      %v594 = vadd.f32 0.0, %v593
      %v595 = vpop.f32.mrf.mxu0
      %v596 = vpop.f32.mrf.mxu0
      %v597 = vadd.f32 0.0, %v596
      %v598 = vpop.f32.mrf.mxu0
      %599 = vmatprep.mubr.bf16.mxu0 0
      %600 = vmatmul.mubr.bf16.gmra.mxu0 %v451
      %v601 = vpop.f32.mrf.mxu0
      %v602 = vadd.f32 0.0, %v601
      %v603 = vpop.f32.mrf.mxu0
      %v604 = vpop.f32.mrf.mxu0
      %v605 = vadd.f32 0.0, %v604
      %v606 = vpop.f32.mrf.mxu0
      %607 = vmatprep.mubr.bf16.mxu0 0
      %608 = vmatmul.mubr.bf16.gmra.mxu0 %v454
      %v609 = vpop.f32.mrf.mxu0
      %v610 = vadd.f32 0.0, %v609
      %v611 = vpop.f32.mrf.mxu0
      %v612 = vpop.f32.mrf.mxu0
      %v613 = vadd.f32 0.0, %v612
      %v614 = vpop.f32.mrf.mxu0
      %615 = vmatprep.mubr.bf16.mxu0 0
      %616 = vmatmul.mubr.bf16.gmra.mxu0 %v457
      %v617 = vpop.f32.mrf.mxu0
      %v618 = vadd.f32 0.0, %v617
      %v619 = vpop.f32.mrf.mxu0
      %v620 = vpop.f32.mrf.mxu0
      %v621 = vadd.f32 0.0, %v620
      %v622 = vpop.f32.mrf.mxu0
      %623 = vdwg.mxu0
      %v624 = vld [vmem:[%s2] sm:$0x1]
      %v626 = vlaneseq
      %v627 = vshrl.u32 %v626, 7
      %v628 = vsub.s32 0, %v627
      %v629 = vrot.slane %v624, %v628
      %v631 = vmul.f32 %v498, %v629
      %v632 = vmul.f32 %v501, %v629
      %v633 = vmul.f32 %v506, %v629
      %v634 = vmul.f32 %v509, %v629
      %v635 = vmul.f32 %v514, %v629
      %v636 = vmul.f32 %v517, %v629
      %v637 = vmul.f32 %v522, %v629
      %v638 = vmul.f32 %v525, %v629
      %v639 = vmul.f32 %v530, %v629
      %v640 = vmul.f32 %v533, %v629
      %v641 = vmul.f32 %v538, %v629
      %v642 = vmul.f32 %v541, %v629
      %v643 = vmul.f32 %v546, %v629
      %v644 = vmul.f32 %v549, %v629
      %v645 = vmul.f32 %v554, %v629
      %v646 = vmul.f32 %v557, %v629
      %v647 = vmul.f32 %v562, %v629
      %v648 = vmul.f32 %v565, %v629
      %v649 = vmul.f32 %v570, %v629
      %v650 = vmul.f32 %v573, %v629
      %v651 = vmul.f32 %v578, %v629
      %v652 = vmul.f32 %v581, %v629
      %v653 = vmul.f32 %v586, %v629
      %v654 = vmul.f32 %v589, %v629
      %v655 = vmul.f32 %v594, %v629
      %v656 = vmul.f32 %v597, %v629
      %v657 = vmul.f32 %v602, %v629
      %v658 = vmul.f32 %v605, %v629
      %v659 = vmul.f32 %v610, %v629
      %v660 = vmul.f32 %v613, %v629
      %v661 = vmul.f32 %v618, %v629
      %v662 = vmul.f32 %v621, %v629
      %v663 = vld [vmem:[%s3] sm:$0x1]
      %v665 = vlaneseq
      %v666 = vshrl.u32 %v665, 7
      %v667 = vsub.s32 0, %v666
      %v668 = vrot.slane %v663, %v667
      %v670 = vadd.f32 %v631, %v668
      %v671 = vadd.f32 %v632, %v668
      %v672 = vadd.f32 %v633, %v668
      %v673 = vadd.f32 %v634, %v668
      %v674 = vadd.f32 %v635, %v668
      %v675 = vadd.f32 %v636, %v668
      %v676 = vadd.f32 %v637, %v668
      %v677 = vadd.f32 %v638, %v668
      %v678 = vadd.f32 %v639, %v668
      %v679 = vadd.f32 %v640, %v668
      %v680 = vadd.f32 %v641, %v668
      %v681 = vadd.f32 %v642, %v668
      %v682 = vadd.f32 %v643, %v668
      %v683 = vadd.f32 %v644, %v668
      %v684 = vadd.f32 %v645, %v668
      %v685 = vadd.f32 %v646, %v668
      %v686 = vadd.f32 %v647, %v668
      %v687 = vadd.f32 %v648, %v668
      %v688 = vadd.f32 %v649, %v668
      %v689 = vadd.f32 %v650, %v668
      %v690 = vadd.f32 %v651, %v668
      %v691 = vadd.f32 %v652, %v668
      %v692 = vadd.f32 %v653, %v668
      %v693 = vadd.f32 %v654, %v668
      %v694 = vadd.f32 %v655, %v668
      %v695 = vadd.f32 %v656, %v668
      %v696 = vadd.f32 %v657, %v668
      %v697 = vadd.f32 %v658, %v668
      %v698 = vadd.f32 %v659, %v668
      %v699 = vadd.f32 %v660, %v668
      %v700 = vadd.f32 %v661, %v668
      %v701 = vadd.f32 %v662, %v668
      %v702 = vmax.f32 %v670, 0.0
      %v703 = vmax.f32 %v671, 0.0
      %v704 = vmax.f32 %v672, 0.0
      %v705 = vmax.f32 %v673, 0.0
      %v706 = vmax.f32 %v674, 0.0
      %v707 = vmax.f32 %v675, 0.0
      %v708 = vmax.f32 %v676, 0.0
      %v709 = vmax.f32 %v677, 0.0
      %v710 = vmax.f32 %v678, 0.0
      %v711 = vmax.f32 %v679, 0.0
      %v712 = vmax.f32 %v680, 0.0
      %v713 = vmax.f32 %v681, 0.0
      %v714 = vmax.f32 %v682, 0.0
      %v715 = vmax.f32 %v683, 0.0
      %v716 = vmax.f32 %v684, 0.0
      %v717 = vmax.f32 %v685, 0.0
      %v718 = vmax.f32 %v686, 0.0
      %v719 = vmax.f32 %v687, 0.0
      %v720 = vmax.f32 %v688, 0.0
      %v721 = vmax.f32 %v689, 0.0
      %v722 = vmax.f32 %v690, 0.0
      %v723 = vmax.f32 %v691, 0.0
      %v724 = vmax.f32 %v692, 0.0
      %v725 = vmax.f32 %v693, 0.0
      %v726 = vmax.f32 %v694, 0.0
      %v727 = vmax.f32 %v695, 0.0
      %v728 = vmax.f32 %v696, 0.0
      %v729 = vmax.f32 %v697, 0.0
      %v730 = vmax.f32 %v698, 0.0
      %v731 = vmax.f32 %v699, 0.0
      %v732 = vmax.f32 %v700, 0.0
      %v733 = vmax.f32 %v701, 0.0
      %734 = vst.msk [vmem:[#allocation2] sm:$0xff] %vm410, 0.0
      %735 = vst.msk [vmem:[#allocation2 + $0x8] sm:$0xff] %vm410, 0.0
      %vm736 = vcmask 58368
      %737 = vst.msk [vmem:[#allocation2 + $0x10] sm:$0x3] %vm736, 0.0
      %s738 = scalar_lea.vmem [#allocation2], 408
      %739 = vst.msk [vmem:[%s738] sm:$0xff] %vm410, 0.0
      %740 = vst.msk [vmem:[%s738 + $0x8] sm:$0xff] %vm410, 0.0
      %741 = vst.msk [vmem:[%s738 + $0x10] sm:$0x3] %vm736, 0.0
      %vm742 = vcmask 57344
      %743 = vst.msk [vmem:[#allocation2] sm:$0x1] %vm742, 0.0
      %744 = vst.msk [vmem:[#allocation2 + $0x18] sm:$0x1] %vm742, 0.0
      %745 = vst.msk [vmem:[#allocation2 + $0x30] sm:$0x1] %vm742, 0.0
      %746 = vst.msk [vmem:[#allocation2 + $0x48] sm:$0x1] %vm742, 0.0
      %747 = vst.msk [vmem:[#allocation2 + $0x60] sm:$0x1] %vm742, 0.0
      %748 = vst.msk [vmem:[#allocation2 + $0x78] sm:$0x1] %vm742, 0.0
      %749 = vst.msk [vmem:[#allocation2 + $0x90] sm:$0x1] %vm742, 0.0
      %750 = vst.msk [vmem:[#allocation2 + $0xa8] sm:$0x1] %vm742, 0.0
      %751 = vst.msk [vmem:[#allocation2 + $0xc0] sm:$0x1] %vm742, 0.0
      %752 = vst.msk [vmem:[#allocation2 + $0xd8] sm:$0x1] %vm742, 0.0
      %753 = vst.msk [vmem:[#allocation2 + $0xf0] sm:$0x1] %vm742, 0.0
      %754 = vst.msk [vmem:[#allocation2 + $0x108] sm:$0x1] %vm742, 0.0
      %755 = vst.msk [vmem:[#allocation2 + $0x120] sm:$0x1] %vm742, 0.0
      %756 = vst.msk [vmem:[#allocation2 + $0x138] sm:$0x1] %vm742, 0.0
      %757 = vst.msk [vmem:[#allocation2 + $0x150] sm:$0x1] %vm742, 0.0
      %758 = vst.msk [vmem:[#allocation2 + $0x168] sm:$0x1] %vm742, 0.0
      %759 = vst.msk [vmem:[#allocation2 + $0x180] sm:$0x1] %vm742, 0.0
      %760 = vst.msk [vmem:[#allocation2 + $0x198] sm:$0x1] %vm742, 0.0
      %761 = vst.msk [vmem:[#allocation2 + $0x11] sm:$0x1] %vm742, 0.0
      %762 = vst.msk [vmem:[#allocation2 + $0x29] sm:$0x1] %vm742, 0.0
      %763 = vst.msk [vmem:[#allocation2 + $0x41] sm:$0x1] %vm742, 0.0
      %764 = vst.msk [vmem:[#allocation2 + $0x59] sm:$0x1] %vm742, 0.0
      %765 = vst.msk [vmem:[#allocation2 + $0x71] sm:$0x1] %vm742, 0.0
      %766 = vst.msk [vmem:[#allocation2 + $0x89] sm:$0x1] %vm742, 0.0
      %767 = vst.msk [vmem:[#allocation2 + $0xa1] sm:$0x1] %vm742, 0.0
      %768 = vst.msk [vmem:[#allocation2 + $0xb9] sm:$0x1] %vm742, 0.0
      %769 = vst.msk [vmem:[#allocation2 + $0xd1] sm:$0x1] %vm742, 0.0
      %770 = vst.msk [vmem:[#allocation2 + $0xe9] sm:$0x1] %vm742, 0.0
      %771 = vst.msk [vmem:[#allocation2 + $0x101] sm:$0x1] %vm742, 0.0
      %772 = vst.msk [vmem:[#allocation2 + $0x119] sm:$0x1] %vm742, 0.0
      %773 = vst.msk [vmem:[#allocation2 + $0x131] sm:$0x1] %vm742, 0.0
      %774 = vst.msk [vmem:[#allocation2 + $0x149] sm:$0x1] %vm742, 0.0
      %775 = vst.msk [vmem:[#allocation2 + $0x161] sm:$0x1] %vm742, 0.0
      %776 = vst.msk [vmem:[#allocation2 + $0x179] sm:$0x1] %vm742, 0.0
      %777 = vst.msk [vmem:[#allocation2 + $0x191] sm:$0x1] %vm742, 0.0
      %778 = vst.msk [vmem:[#allocation2 + $0x1a9] sm:$0x1] %vm742, 0.0
      %s779 = scalar_lea.vmem [#allocation2], 24
      %780 = vst.msk [vmem:[%s779 + $0x1] sm:$0xff] %vm410, %v702
      %781 = vst.msk [vmem:[%s779 + $0x9] sm:$0xff] %vm410, %v703
      %782 = vst.msk [vmem:[%s779 + $0x19] sm:$0xff] %vm410, %v704
      %783 = vst.msk [vmem:[%s779 + $0x21] sm:$0xff] %vm410, %v705
      %784 = vst.msk [vmem:[%s779 + $0x31] sm:$0xff] %vm410, %v706
      %785 = vst.msk [vmem:[%s779 + $0x39] sm:$0xff] %vm410, %v707
      %786 = vst.msk [vmem:[%s779 + $0x49] sm:$0xff] %vm410, %v708
      %787 = vst.msk [vmem:[%s779 + $0x51] sm:$0xff] %vm410, %v709
      %788 = vst.msk [vmem:[%s779 + $0x61] sm:$0xff] %vm410, %v710
      %789 = vst.msk [vmem:[%s779 + $0x69] sm:$0xff] %vm410, %v711
      %790 = vst.msk [vmem:[%s779 + $0x79] sm:$0xff] %vm410, %v712
      %791 = vst.msk [vmem:[%s779 + $0x81] sm:$0xff] %vm410, %v713
      %792 = vst.msk [vmem:[%s779 + $0x91] sm:$0xff] %vm410, %v714
      %793 = vst.msk [vmem:[%s779 + $0x99] sm:$0xff] %vm410, %v715
      %794 = vst.msk [vmem:[%s779 + $0xa9] sm:$0xff] %vm410, %v716
      %795 = vst.msk [vmem:[%s779 + $0xb1] sm:$0xff] %vm410, %v717
      %796 = vst.msk [vmem:[%s779 + $0xc1] sm:$0xff] %vm410, %v718
      %797 = vst.msk [vmem:[%s779 + $0xc9] sm:$0xff] %vm410, %v719
      %798 = vst.msk [vmem:[%s779 + $0xd9] sm:$0xff] %vm410, %v720
      %799 = vst.msk [vmem:[%s779 + $0xe1] sm:$0xff] %vm410, %v721
      %800 = vst.msk [vmem:[%s779 + $0xf1] sm:$0xff] %vm410, %v722
      %801 = vst.msk [vmem:[%s779 + $0xf9] sm:$0xff] %vm410, %v723
      %802 = vst.msk [vmem:[%s779 + $0x109] sm:$0xff] %vm410, %v724
      %803 = vst.msk [vmem:[%s779 + $0x111] sm:$0xff] %vm410, %v725
      %804 = vst.msk [vmem:[%s779 + $0x121] sm:$0xff] %vm410, %v726
      %805 = vst.msk [vmem:[%s779 + $0x129] sm:$0xff] %vm410, %v727
      %806 = vst.msk [vmem:[%s779 + $0x139] sm:$0xff] %vm410, %v728
      %807 = vst.msk [vmem:[%s779 + $0x141] sm:$0xff] %vm410, %v729
      %808 = vst.msk [vmem:[%s779 + $0x151] sm:$0xff] %vm410, %v730
      %809 = vst.msk [vmem:[%s779 + $0x159] sm:$0xff] %vm410, %v731
      %810 = vst.msk [vmem:[%s779 + $0x169] sm:$0xff] %vm410, %v732
      %811 = vst.msk [vmem:[%s779 + $0x171] sm:$0xff] %vm410, %v733
      %v812 = vld [vmem:[#allocation2] sm:$0xff]
      %v813 = vld [vmem:[#allocation2 + $0x8] sm:$0xff]
      %v814 = vld [vmem:[#allocation2 + $0x18] sm:$0xff]
      %v815 = vld [vmem:[#allocation2 + $0x20] sm:$0xff]
      %v816 = vld [vmem:[#allocation2 + $0x30] sm:$0xff]
      %v817 = vld [vmem:[#allocation2 + $0x38] sm:$0xff]
      %v818 = vld [vmem:[#allocation2 + $0x48] sm:$0xff]
      %v819 = vld [vmem:[#allocation2 + $0x50] sm:$0xff]
      %v820 = vld [vmem:[#allocation2 + $0x60] sm:$0xff]
      %v821 = vld [vmem:[#allocation2 + $0x68] sm:$0xff]
      %v822 = vld [vmem:[#allocation2 + $0x78] sm:$0xff]
      %v823 = vld [vmem:[#allocation2 + $0x80] sm:$0xff]
      %v824 = vld [vmem:[#allocation2 + $0x90] sm:$0xff]
      %v825 = vld [vmem:[#allocation2 + $0x98] sm:$0xff]
      %v826 = vld [vmem:[#allocation2 + $0xa8] sm:$0xff]
      %v827 = vld [vmem:[#allocation2 + $0xb0] sm:$0xff]
      %v828 = vld [vmem:[#allocation2 + $0xc0] sm:$0xff]
      %v829 = vld [vmem:[#allocation2 + $0xc8] sm:$0xff]
      %v830 = vld [vmem:[#allocation2 + $0xd8] sm:$0xff]
      %v831 = vld [vmem:[#allocation2 + $0xe0] sm:$0xff]
      %v832 = vld [vmem:[#allocation2 + $0xf0] sm:$0xff]
      %v833 = vld [vmem:[#allocation2 + $0xf8] sm:$0xff]
      %v834 = vld [vmem:[#allocation2 + $0x108] sm:$0xff]
      %v835 = vld [vmem:[#allocation2 + $0x110] sm:$0xff]
      %v836 = vld [vmem:[#allocation2 + $0x120] sm:$0xff]
      %v837 = vld [vmem:[#allocation2 + $0x128] sm:$0xff]
      %v838 = vld [vmem:[#allocation2 + $0x138] sm:$0xff]
      %v839 = vld [vmem:[#allocation2 + $0x140] sm:$0xff]
      %v840 = vld [vmem:[#allocation2 + $0x150] sm:$0xff]
      %v841 = vld [vmem:[#allocation2 + $0x158] sm:$0xff]
      %v842 = vld [vmem:[#allocation2 + $0x168] sm:$0xff]
      %v843 = vld [vmem:[#allocation2 + $0x170] sm:$0xff]
      %v844 = vld [vmem:[%s4] sm:$0x1]
      %v846 = vlaneseq
      %v847 = vshrl.u32 %v846, 7
      %v848 = vsub.s32 0, %v847
      %v849 = vrot.slane %v844, %v848
      %v851 = vmul.f32 %v812, %v849
      %v852 = vmul.f32 %v813, %v849
      %v853 = vmul.f32 %v814, %v849
      %v854 = vmul.f32 %v815, %v849
      %v855 = vmul.f32 %v816, %v849
      %v856 = vmul.f32 %v817, %v849
      %v857 = vmul.f32 %v818, %v849
      %v858 = vmul.f32 %v819, %v849
      %v859 = vmul.f32 %v820, %v849
      %v860 = vmul.f32 %v821, %v849
      %v861 = vmul.f32 %v822, %v849
      %v862 = vmul.f32 %v823, %v849
      %v863 = vmul.f32 %v824, %v849
      %v864 = vmul.f32 %v825, %v849
      %v865 = vmul.f32 %v826, %v849
      %v866 = vmul.f32 %v827, %v849
      %v867 = vmul.f32 %v828, %v849
      %v868 = vmul.f32 %v829, %v849
      %v869 = vmul.f32 %v830, %v849
      %v870 = vmul.f32 %v831, %v849
      %v871 = vmul.f32 %v832, %v849
      %v872 = vmul.f32 %v833, %v849
      %v873 = vmul.f32 %v834, %v849
      %v874 = vmul.f32 %v835, %v849
      %v875 = vmul.f32 %v836, %v849
      %v876 = vmul.f32 %v837, %v849
      %v877 = vmul.f32 %v838, %v849
      %v878 = vmul.f32 %v839, %v849
      %v879 = vmul.f32 %v840, %v849
      %v880 = vmul.f32 %v841, %v849
      %v881 = vmul.f32 %v842, %v849
      %v882 = vmul.f32 %v843, %v849
      %v883 = vadd.f32 %v851, 0.0
      %v884 = vadd.f32 %v852, 0.0
      %v885 = vadd.f32 %v853, 0.0
      %v886 = vadd.f32 %v854, 0.0
      %v887 = vadd.f32 %v855, 0.0
      %v888 = vadd.f32 %v856, 0.0
      %v889 = vadd.f32 %v857, 0.0
      %v890 = vadd.f32 %v858, 0.0
      %v891 = vadd.f32 %v859, 0.0
      %v892 = vadd.f32 %v860, 0.0
      %v893 = vadd.f32 %v861, 0.0
      %v894 = vadd.f32 %v862, 0.0
      %v895 = vadd.f32 %v863, 0.0
      %v896 = vadd.f32 %v864, 0.0
      %v897 = vadd.f32 %v865, 0.0
      %v898 = vadd.f32 %v866, 0.0
      %v899 = vadd.f32 %v867, 0.0
      %v900 = vadd.f32 %v868, 0.0
      %v901 = vadd.f32 %v869, 0.0
      %v902 = vadd.f32 %v870, 0.0
      %v903 = vadd.f32 %v871, 0.0
      %v904 = vadd.f32 %v872, 0.0
      %v905 = vadd.f32 %v873, 0.0
      %v906 = vadd.f32 %v874, 0.0
      %v907 = vadd.f32 %v875, 0.0
      %v908 = vadd.f32 %v876, 0.0
      %v909 = vadd.f32 %v877, 0.0
      %v910 = vadd.f32 %v878, 0.0
      %v911 = vadd.f32 %v879, 0.0
      %v912 = vadd.f32 %v880, 0.0
      %v913 = vadd.f32 %v881, 0.0
      %v914 = vadd.f32 %v882, 0.0
      %v915 = vld [vmem:[#allocation2 + $0x1] sm:$0xff]
      %v916 = vld [vmem:[#allocation2 + $0x9] sm:$0xff]
      %v917 = vld [vmem:[#allocation2 + $0x19] sm:$0xff]
      %v918 = vld [vmem:[#allocation2 + $0x21] sm:$0xff]
      %v919 = vld [vmem:[#allocation2 + $0x31] sm:$0xff]
      %v920 = vld [vmem:[#allocation2 + $0x39] sm:$0xff]
      %v921 = vld [vmem:[#allocation2 + $0x49] sm:$0xff]
      %v922 = vld [vmem:[#allocation2 + $0x51] sm:$0xff]
      %v923 = vld [vmem:[#allocation2 + $0x61] sm:$0xff]
      %v924 = vld [vmem:[#allocation2 + $0x69] sm:$0xff]
      %v925 = vld [vmem:[#allocation2 + $0x79] sm:$0xff]
      %v926 = vld [vmem:[#allocation2 + $0x81] sm:$0xff]
      %v927 = vld [vmem:[#allocation2 + $0x91] sm:$0xff]
      %v928 = vld [vmem:[#allocation2 + $0x99] sm:$0xff]
      %v929 = vld [vmem:[#allocation2 + $0xa9] sm:$0xff]
      %v930 = vld [vmem:[#allocation2 + $0xb1] sm:$0xff]
      %v931 = vld [vmem:[#allocation2 + $0xc1] sm:$0xff]
      %v932 = vld [vmem:[#allocation2 + $0xc9] sm:$0xff]
      %v933 = vld [vmem:[#allocation2 + $0xd9] sm:$0xff]
      %v934 = vld [vmem:[#allocation2 + $0xe1] sm:$0xff]
      %v935 = vld [vmem:[#allocation2 + $0xf1] sm:$0xff]
      %v936 = vld [vmem:[#allocation2 + $0xf9] sm:$0xff]
      %v937 = vld [vmem:[#allocation2 + $0x109] sm:$0xff]
      %v938 = vld [vmem:[#allocation2 + $0x111] sm:$0xff]
      %v939 = vld [vmem:[#allocation2 + $0x121] sm:$0xff]
      %v940 = vld [vmem:[#allocation2 + $0x129] sm:$0xff]
      %v941 = vld [vmem:[#allocation2 + $0x139] sm:$0xff]
      %v942 = vld [vmem:[#allocation2 + $0x141] sm:$0xff]
      %v943 = vld [vmem:[#allocation2 + $0x151] sm:$0xff]
      %v944 = vld [vmem:[#allocation2 + $0x159] sm:$0xff]
      %v945 = vld [vmem:[#allocation2 + $0x169] sm:$0xff]
      %v946 = vld [vmem:[#allocation2 + $0x171] sm:$0xff]
      %s947 = scalar_lea.vmem %s4, 1
      %v948 = vld [vmem:[%s947] sm:$0x1]
      %v950 = vlaneseq
      %v951 = vshrl.u32 %v950, 7
      %v952 = vsub.s32 0, %v951
      %v953 = vrot.slane %v948, %v952
      %v955 = vmul.f32 %v915, %v953
      %v956 = vmul.f32 %v916, %v953
      %v957 = vmul.f32 %v917, %v953
      %v958 = vmul.f32 %v918, %v953
      %v959 = vmul.f32 %v919, %v953
      %v960 = vmul.f32 %v920, %v953
      %v961 = vmul.f32 %v921, %v953
      %v962 = vmul.f32 %v922, %v953
      %v963 = vmul.f32 %v923, %v953
      %v964 = vmul.f32 %v924, %v953
      %v965 = vmul.f32 %v925, %v953
      %v966 = vmul.f32 %v926, %v953
      %v967 = vmul.f32 %v927, %v953
      %v968 = vmul.f32 %v928, %v953
      %v969 = vmul.f32 %v929, %v953
      %v970 = vmul.f32 %v930, %v953
      %v971 = vmul.f32 %v931, %v953
      %v972 = vmul.f32 %v932, %v953
      %v973 = vmul.f32 %v933, %v953
      %v974 = vmul.f32 %v934, %v953
      %v975 = vmul.f32 %v935, %v953
      %v976 = vmul.f32 %v936, %v953
      %v977 = vmul.f32 %v937, %v953
      %v978 = vmul.f32 %v938, %v953
      %v979 = vmul.f32 %v939, %v953
      %v980 = vmul.f32 %v940, %v953
      %v981 = vmul.f32 %v941, %v953
      %v982 = vmul.f32 %v942, %v953
      %v983 = vmul.f32 %v943, %v953
      %v984 = vmul.f32 %v944, %v953
      %v985 = vmul.f32 %v945, %v953
      %v986 = vmul.f32 %v946, %v953
      %v987 = vadd.f32 %v883, %v955
      %v988 = vadd.f32 %v884, %v956
      %v989 = vadd.f32 %v885, %v957
      %v990 = vadd.f32 %v886, %v958
      %v991 = vadd.f32 %v887, %v959
      %v992 = vadd.f32 %v888, %v960
      %v993 = vadd.f32 %v889, %v961
      %v994 = vadd.f32 %v890, %v962
      %v995 = vadd.f32 %v891, %v963
      %v996 = vadd.f32 %v892, %v964
      %v997 = vadd.f32 %v893, %v965
      %v998 = vadd.f32 %v894, %v966
      %v999 = vadd.f32 %v895, %v967
      %v1000 = vadd.f32 %v896, %v968
      %v1001 = vadd.f32 %v897, %v969
      %v1002 = vadd.f32 %v898, %v970
      %v1003 = vadd.f32 %v899, %v971
      %v1004 = vadd.f32 %v900, %v972
      %v1005 = vadd.f32 %v901, %v973
      %v1006 = vadd.f32 %v902, %v974
      %v1007 = vadd.f32 %v903, %v975
      %v1008 = vadd.f32 %v904, %v976
      %v1009 = vadd.f32 %v905, %v977
      %v1010 = vadd.f32 %v906, %v978
      %v1011 = vadd.f32 %v907, %v979
      %v1012 = vadd.f32 %v908, %v980
      %v1013 = vadd.f32 %v909, %v981
      %v1014 = vadd.f32 %v910, %v982
      %v1015 = vadd.f32 %v911, %v983
      %v1016 = vadd.f32 %v912, %v984
      %v1017 = vadd.f32 %v913, %v985
      %v1018 = vadd.f32 %v914, %v986
      %v1019 = vld [vmem:[#allocation2 + $0x2] sm:$0xff]
      %v1020 = vld [vmem:[#allocation2 + $0xa] sm:$0xff]
      %v1021 = vld [vmem:[#allocation2 + $0x1a] sm:$0xff]
      %v1022 = vld [vmem:[#allocation2 + $0x22] sm:$0xff]
      %v1023 = vld [vmem:[#allocation2 + $0x32] sm:$0xff]
      %v1024 = vld [vmem:[#allocation2 + $0x3a] sm:$0xff]
      %v1025 = vld [vmem:[#allocation2 + $0x4a] sm:$0xff]
      %v1026 = vld [vmem:[#allocation2 + $0x52] sm:$0xff]
      %v1027 = vld [vmem:[#allocation2 + $0x62] sm:$0xff]
      %v1028 = vld [vmem:[#allocation2 + $0x6a] sm:$0xff]
      %v1029 = vld [vmem:[#allocation2 + $0x7a] sm:$0xff]
      %v1030 = vld [vmem:[#allocation2 + $0x82] sm:$0xff]
      %v1031 = vld [vmem:[#allocation2 + $0x92] sm:$0xff]
      %v1032 = vld [vmem:[#allocation2 + $0x9a] sm:$0xff]
      %v1033 = vld [vmem:[#allocation2 + $0xaa] sm:$0xff]
      %v1034 = vld [vmem:[#allocation2 + $0xb2] sm:$0xff]
      %v1035 = vld [vmem:[#allocation2 + $0xc2] sm:$0xff]
      %v1036 = vld [vmem:[#allocation2 + $0xca] sm:$0xff]
      %v1037 = vld [vmem:[#allocation2 + $0xda] sm:$0xff]
      %v1038 = vld [vmem:[#allocation2 + $0xe2] sm:$0xff]
      %v1039 = vld [vmem:[#allocation2 + $0xf2] sm:$0xff]
      %v1040 = vld [vmem:[#allocation2 + $0xfa] sm:$0xff]
      %v1041 = vld [vmem:[#allocation2 + $0x10a] sm:$0xff]
      %v1042 = vld [vmem:[#allocation2 + $0x112] sm:$0xff]
      %v1043 = vld [vmem:[#allocation2 + $0x122] sm:$0xff]
      %v1044 = vld [vmem:[#allocation2 + $0x12a] sm:$0xff]
      %v1045 = vld [vmem:[#allocation2 + $0x13a] sm:$0xff]
      %v1046 = vld [vmem:[#allocation2 + $0x142] sm:$0xff]
      %v1047 = vld [vmem:[#allocation2 + $0x152] sm:$0xff]
      %v1048 = vld [vmem:[#allocation2 + $0x15a] sm:$0xff]
      %v1049 = vld [vmem:[#allocation2 + $0x16a] sm:$0xff]
      %v1050 = vld [vmem:[#allocation2 + $0x172] sm:$0xff]
      %s1051 = scalar_lea.vmem %s4, 2
      %v1052 = vld [vmem:[%s1051] sm:$0x1]
      %v1054 = vlaneseq
      %v1055 = vshrl.u32 %v1054, 7
      %v1056 = vsub.s32 0, %v1055
      %v1057 = vrot.slane %v1052, %v1056
      %v1059 = vmul.f32 %v1019, %v1057
      %v1060 = vmul.f32 %v1020, %v1057
      %v1061 = vmul.f32 %v1021, %v1057
      %v1062 = vmul.f32 %v1022, %v1057
      %v1063 = vmul.f32 %v1023, %v1057
      %v1064 = vmul.f32 %v1024, %v1057
      %v1065 = vmul.f32 %v1025, %v1057
      %v1066 = vmul.f32 %v1026, %v1057
      %v1067 = vmul.f32 %v1027, %v1057
      %v1068 = vmul.f32 %v1028, %v1057
      %v1069 = vmul.f32 %v1029, %v1057
      %v1070 = vmul.f32 %v1030, %v1057
      %v1071 = vmul.f32 %v1031, %v1057
      %v1072 = vmul.f32 %v1032, %v1057
      %v1073 = vmul.f32 %v1033, %v1057
      %v1074 = vmul.f32 %v1034, %v1057
      %v1075 = vmul.f32 %v1035, %v1057
      %v1076 = vmul.f32 %v1036, %v1057
      %v1077 = vmul.f32 %v1037, %v1057
      %v1078 = vmul.f32 %v1038, %v1057
      %v1079 = vmul.f32 %v1039, %v1057
      %v1080 = vmul.f32 %v1040, %v1057
      %v1081 = vmul.f32 %v1041, %v1057
      %v1082 = vmul.f32 %v1042, %v1057
      %v1083 = vmul.f32 %v1043, %v1057
      %v1084 = vmul.f32 %v1044, %v1057
      %v1085 = vmul.f32 %v1045, %v1057
      %v1086 = vmul.f32 %v1046, %v1057
      %v1087 = vmul.f32 %v1047, %v1057
      %v1088 = vmul.f32 %v1048, %v1057
      %v1089 = vmul.f32 %v1049, %v1057
      %v1090 = vmul.f32 %v1050, %v1057
      %v1091 = vadd.f32 %v987, %v1059
      %v1092 = vadd.f32 %v988, %v1060
      %v1093 = vadd.f32 %v989, %v1061
      %v1094 = vadd.f32 %v990, %v1062
      %v1095 = vadd.f32 %v991, %v1063
      %v1096 = vadd.f32 %v992, %v1064
      %v1097 = vadd.f32 %v993, %v1065
      %v1098 = vadd.f32 %v994, %v1066
      %v1099 = vadd.f32 %v995, %v1067
      %v1100 = vadd.f32 %v996, %v1068
      %v1101 = vadd.f32 %v997, %v1069
      %v1102 = vadd.f32 %v998, %v1070
      %v1103 = vadd.f32 %v999, %v1071
      %v1104 = vadd.f32 %v1000, %v1072
      %v1105 = vadd.f32 %v1001, %v1073
      %v1106 = vadd.f32 %v1002, %v1074
      %v1107 = vadd.f32 %v1003, %v1075
      %v1108 = vadd.f32 %v1004, %v1076
      %v1109 = vadd.f32 %v1005, %v1077
      %v1110 = vadd.f32 %v1006, %v1078
      %v1111 = vadd.f32 %v1007, %v1079
      %v1112 = vadd.f32 %v1008, %v1080
      %v1113 = vadd.f32 %v1009, %v1081
      %v1114 = vadd.f32 %v1010, %v1082
      %v1115 = vadd.f32 %v1011, %v1083
      %v1116 = vadd.f32 %v1012, %v1084
      %v1117 = vadd.f32 %v1013, %v1085
      %v1118 = vadd.f32 %v1014, %v1086
      %v1119 = vadd.f32 %v1015, %v1087
      %v1120 = vadd.f32 %v1016, %v1088
      %v1121 = vadd.f32 %v1017, %v1089
      %v1122 = vadd.f32 %v1018, %v1090
      %v1123 = vld [vmem:[%s779] sm:$0xff]
      %v1124 = vld [vmem:[%s779 + $0x8] sm:$0xff]
      %v1125 = vld [vmem:[%s779 + $0x18] sm:$0xff]
      %v1126 = vld [vmem:[%s779 + $0x20] sm:$0xff]
      %v1127 = vld [vmem:[%s779 + $0x30] sm:$0xff]
      %v1128 = vld [vmem:[%s779 + $0x38] sm:$0xff]
      %v1129 = vld [vmem:[%s779 + $0x48] sm:$0xff]
      %v1130 = vld [vmem:[%s779 + $0x50] sm:$0xff]
      %v1131 = vld [vmem:[%s779 + $0x60] sm:$0xff]
      %v1132 = vld [vmem:[%s779 + $0x68] sm:$0xff]
      %v1133 = vld [vmem:[%s779 + $0x78] sm:$0xff]
      %v1134 = vld [vmem:[%s779 + $0x80] sm:$0xff]
      %v1135 = vld [vmem:[%s779 + $0x90] sm:$0xff]
      %v1136 = vld [vmem:[%s779 + $0x98] sm:$0xff]
      %v1137 = vld [vmem:[%s779 + $0xa8] sm:$0xff]
      %v1138 = vld [vmem:[%s779 + $0xb0] sm:$0xff]
      %v1139 = vld [vmem:[%s779 + $0xc0] sm:$0xff]
      %v1140 = vld [vmem:[%s779 + $0xc8] sm:$0xff]
      %v1141 = vld [vmem:[%s779 + $0xd8] sm:$0xff]
      %v1142 = vld [vmem:[%s779 + $0xe0] sm:$0xff]
      %v1143 = vld [vmem:[%s779 + $0xf0] sm:$0xff]
      %v1144 = vld [vmem:[%s779 + $0xf8] sm:$0xff]
      %v1145 = vld [vmem:[%s779 + $0x108] sm:$0xff]
      %v1146 = vld [vmem:[%s779 + $0x110] sm:$0xff]
      %v1147 = vld [vmem:[%s779 + $0x120] sm:$0xff]
      %v1148 = vld [vmem:[%s779 + $0x128] sm:$0xff]
      %v1149 = vld [vmem:[%s779 + $0x138] sm:$0xff]
      %v1150 = vld [vmem:[%s779 + $0x140] sm:$0xff]
      %v1151 = vld [vmem:[%s779 + $0x150] sm:$0xff]
      %v1152 = vld [vmem:[%s779 + $0x158] sm:$0xff]
      %v1153 = vld [vmem:[%s779 + $0x168] sm:$0xff]
      %v1154 = vld [vmem:[%s779 + $0x170] sm:$0xff]
      %s1155 = scalar_lea.vmem %s4, 3
      %v1156 = vld [vmem:[%s1155] sm:$0x1]
      %v1158 = vlaneseq
      %v1159 = vshrl.u32 %v1158, 7
      %v1160 = vsub.s32 0, %v1159
      %v1161 = vrot.slane %v1156, %v1160
      %v1163 = vmul.f32 %v1123, %v1161
      %v1164 = vmul.f32 %v1124, %v1161
      %v1165 = vmul.f32 %v1125, %v1161
      %v1166 = vmul.f32 %v1126, %v1161
      %v1167 = vmul.f32 %v1127, %v1161
      %v1168 = vmul.f32 %v1128, %v1161
      %v1169 = vmul.f32 %v1129, %v1161
      %v1170 = vmul.f32 %v1130, %v1161
      %v1171 = vmul.f32 %v1131, %v1161
      %v1172 = vmul.f32 %v1132, %v1161
      %v1173 = vmul.f32 %v1133, %v1161
      %v1174 = vmul.f32 %v1134, %v1161
      %v1175 = vmul.f32 %v1135, %v1161
      %v1176 = vmul.f32 %v1136, %v1161
      %v1177 = vmul.f32 %v1137, %v1161
      %v1178 = vmul.f32 %v1138, %v1161
      %v1179 = vmul.f32 %v1139, %v1161
      %v1180 = vmul.f32 %v1140, %v1161
      %v1181 = vmul.f32 %v1141, %v1161
      %v1182 = vmul.f32 %v1142, %v1161
      %v1183 = vmul.f32 %v1143, %v1161
      %v1184 = vmul.f32 %v1144, %v1161
      %v1185 = vmul.f32 %v1145, %v1161
      %v1186 = vmul.f32 %v1146, %v1161
      %v1187 = vmul.f32 %v1147, %v1161
      %v1188 = vmul.f32 %v1148, %v1161
      %v1189 = vmul.f32 %v1149, %v1161
      %v1190 = vmul.f32 %v1150, %v1161
      %v1191 = vmul.f32 %v1151, %v1161
      %v1192 = vmul.f32 %v1152, %v1161
      %v1193 = vmul.f32 %v1153, %v1161
      %v1194 = vmul.f32 %v1154, %v1161
      %v1195 = vadd.f32 %v1091, %v1163
      %v1196 = vadd.f32 %v1092, %v1164
      %v1197 = vadd.f32 %v1093, %v1165
      %v1198 = vadd.f32 %v1094, %v1166
      %v1199 = vadd.f32 %v1095, %v1167
      %v1200 = vadd.f32 %v1096, %v1168
      %v1201 = vadd.f32 %v1097, %v1169
      %v1202 = vadd.f32 %v1098, %v1170
      %v1203 = vadd.f32 %v1099, %v1171
      %v1204 = vadd.f32 %v1100, %v1172
      %v1205 = vadd.f32 %v1101, %v1173
      %v1206 = vadd.f32 %v1102, %v1174
      %v1207 = vadd.f32 %v1103, %v1175
      %v1208 = vadd.f32 %v1104, %v1176
      %v1209 = vadd.f32 %v1105, %v1177
      %v1210 = vadd.f32 %v1106, %v1178
      %v1211 = vadd.f32 %v1107, %v1179
      %v1212 = vadd.f32 %v1108, %v1180
      %v1213 = vadd.f32 %v1109, %v1181
      %v1214 = vadd.f32 %v1110, %v1182
      %v1215 = vadd.f32 %v1111, %v1183
      %v1216 = vadd.f32 %v1112, %v1184
      %v1217 = vadd.f32 %v1113, %v1185
      %v1218 = vadd.f32 %v1114, %v1186
      %v1219 = vadd.f32 %v1115, %v1187
      %v1220 = vadd.f32 %v1116, %v1188
      %v1221 = vadd.f32 %v1117, %v1189
      %v1222 = vadd.f32 %v1118, %v1190
      %v1223 = vadd.f32 %v1119, %v1191
      %v1224 = vadd.f32 %v1120, %v1192
      %v1225 = vadd.f32 %v1121, %v1193
      %v1226 = vadd.f32 %v1122, %v1194
      %v1227 = vld [vmem:[%s779 + $0x1] sm:$0xff]
      %v1228 = vld [vmem:[%s779 + $0x9] sm:$0xff]
      %v1229 = vld [vmem:[%s779 + $0x19] sm:$0xff]
      %v1230 = vld [vmem:[%s779 + $0x21] sm:$0xff]
      %v1231 = vld [vmem:[%s779 + $0x31] sm:$0xff]
      %v1232 = vld [vmem:[%s779 + $0x39] sm:$0xff]
      %v1233 = vld [vmem:[%s779 + $0x49] sm:$0xff]
      %v1234 = vld [vmem:[%s779 + $0x51] sm:$0xff]
      %v1235 = vld [vmem:[%s779 + $0x61] sm:$0xff]
      %v1236 = vld [vmem:[%s779 + $0x69] sm:$0xff]
      %v1237 = vld [vmem:[%s779 + $0x79] sm:$0xff]
      %v1238 = vld [vmem:[%s779 + $0x81] sm:$0xff]
      %v1239 = vld [vmem:[%s779 + $0x91] sm:$0xff]
      %v1240 = vld [vmem:[%s779 + $0x99] sm:$0xff]
      %v1241 = vld [vmem:[%s779 + $0xa9] sm:$0xff]
      %v1242 = vld [vmem:[%s779 + $0xb1] sm:$0xff]
      %v1243 = vld [vmem:[%s779 + $0xc1] sm:$0xff]
      %v1244 = vld [vmem:[%s779 + $0xc9] sm:$0xff]
      %v1245 = vld [vmem:[%s779 + $0xd9] sm:$0xff]
      %v1246 = vld [vmem:[%s779 + $0xe1] sm:$0xff]
      %v1247 = vld [vmem:[%s779 + $0xf1] sm:$0xff]
      %v1248 = vld [vmem:[%s779 + $0xf9] sm:$0xff]
      %v1249 = vld [vmem:[%s779 + $0x109] sm:$0xff]
      %v1250 = vld [vmem:[%s779 + $0x111] sm:$0xff]
      %v1251 = vld [vmem:[%s779 + $0x121] sm:$0xff]
      %v1252 = vld [vmem:[%s779 + $0x129] sm:$0xff]
      %v1253 = vld [vmem:[%s779 + $0x139] sm:$0xff]
      %v1254 = vld [vmem:[%s779 + $0x141] sm:$0xff]
      %v1255 = vld [vmem:[%s779 + $0x151] sm:$0xff]
      %v1256 = vld [vmem:[%s779 + $0x159] sm:$0xff]
      %v1257 = vld [vmem:[%s779 + $0x169] sm:$0xff]
      %v1258 = vld [vmem:[%s779 + $0x171] sm:$0xff]
      %s1259 = scalar_lea.vmem %s4, 4
      %v1260 = vld [vmem:[%s1259] sm:$0x1]
      %v1262 = vlaneseq
      %v1263 = vshrl.u32 %v1262, 7
      %v1264 = vsub.s32 0, %v1263
      %v1265 = vrot.slane %v1260, %v1264
      %v1267 = vmul.f32 %v1227, %v1265
      %v1268 = vmul.f32 %v1228, %v1265
      %v1269 = vmul.f32 %v1229, %v1265
      %v1270 = vmul.f32 %v1230, %v1265
      %v1271 = vmul.f32 %v1231, %v1265
      %v1272 = vmul.f32 %v1232, %v1265
      %v1273 = vmul.f32 %v1233, %v1265
      %v1274 = vmul.f32 %v1234, %v1265
      %v1275 = vmul.f32 %v1235, %v1265
      %v1276 = vmul.f32 %v1236, %v1265
      %v1277 = vmul.f32 %v1237, %v1265
      %v1278 = vmul.f32 %v1238, %v1265
      %v1279 = vmul.f32 %v1239, %v1265
      %v1280 = vmul.f32 %v1240, %v1265
      %v1281 = vmul.f32 %v1241, %v1265
      %v1282 = vmul.f32 %v1242, %v1265
      %v1283 = vmul.f32 %v1243, %v1265
      %v1284 = vmul.f32 %v1244, %v1265
      %v1285 = vmul.f32 %v1245, %v1265
      %v1286 = vmul.f32 %v1246, %v1265
      %v1287 = vmul.f32 %v1247, %v1265
      %v1288 = vmul.f32 %v1248, %v1265
      %v1289 = vmul.f32 %v1249, %v1265
      %v1290 = vmul.f32 %v1250, %v1265
      %v1291 = vmul.f32 %v1251, %v1265
      %v1292 = vmul.f32 %v1252, %v1265
      %v1293 = vmul.f32 %v1253, %v1265
      %v1294 = vmul.f32 %v1254, %v1265
      %v1295 = vmul.f32 %v1255, %v1265
      %v1296 = vmul.f32 %v1256, %v1265
      %v1297 = vmul.f32 %v1257, %v1265
      %v1298 = vmul.f32 %v1258, %v1265
      %v1299 = vadd.f32 %v1195, %v1267
      %v1300 = vadd.f32 %v1196, %v1268
      %v1301 = vadd.f32 %v1197, %v1269
      %v1302 = vadd.f32 %v1198, %v1270
      %v1303 = vadd.f32 %v1199, %v1271
      %v1304 = vadd.f32 %v1200, %v1272
      %v1305 = vadd.f32 %v1201, %v1273
      %v1306 = vadd.f32 %v1202, %v1274
      %v1307 = vadd.f32 %v1203, %v1275
      %v1308 = vadd.f32 %v1204, %v1276
      %v1309 = vadd.f32 %v1205, %v1277
      %v1310 = vadd.f32 %v1206, %v1278
      %v1311 = vadd.f32 %v1207, %v1279
      %v1312 = vadd.f32 %v1208, %v1280
      %v1313 = vadd.f32 %v1209, %v1281
      %v1314 = vadd.f32 %v1210, %v1282
      %v1315 = vadd.f32 %v1211, %v1283
      %v1316 = vadd.f32 %v1212, %v1284
      %v1317 = vadd.f32 %v1213, %v1285
      %v1318 = vadd.f32 %v1214, %v1286
      %v1319 = vadd.f32 %v1215, %v1287
      %v1320 = vadd.f32 %v1216, %v1288
      %v1321 = vadd.f32 %v1217, %v1289
      %v1322 = vadd.f32 %v1218, %v1290
      %v1323 = vadd.f32 %v1219, %v1291
      %v1324 = vadd.f32 %v1220, %v1292
      %v1325 = vadd.f32 %v1221, %v1293
      %v1326 = vadd.f32 %v1222, %v1294
      %v1327 = vadd.f32 %v1223, %v1295
      %v1328 = vadd.f32 %v1224, %v1296
      %v1329 = vadd.f32 %v1225, %v1297
      %v1330 = vadd.f32 %v1226, %v1298
      %v1331 = vld [vmem:[%s779 + $0x2] sm:$0xff]
      %v1332 = vld [vmem:[%s779 + $0xa] sm:$0xff]
      %v1333 = vld [vmem:[%s779 + $0x1a] sm:$0xff]
      %v1334 = vld [vmem:[%s779 + $0x22] sm:$0xff]
      %v1335 = vld [vmem:[%s779 + $0x32] sm:$0xff]
      %v1336 = vld [vmem:[%s779 + $0x3a] sm:$0xff]
      %v1337 = vld [vmem:[%s779 + $0x4a] sm:$0xff]
      %v1338 = vld [vmem:[%s779 + $0x52] sm:$0xff]
      %v1339 = vld [vmem:[%s779 + $0x62] sm:$0xff]
      %v1340 = vld [vmem:[%s779 + $0x6a] sm:$0xff]
      %v1341 = vld [vmem:[%s779 + $0x7a] sm:$0xff]
      %v1342 = vld [vmem:[%s779 + $0x82] sm:$0xff]
      %v1343 = vld [vmem:[%s779 + $0x92] sm:$0xff]
      %v1344 = vld [vmem:[%s779 + $0x9a] sm:$0xff]
      %v1345 = vld [vmem:[%s779 + $0xaa] sm:$0xff]
      %v1346 = vld [vmem:[%s779 + $0xb2] sm:$0xff]
      %v1347 = vld [vmem:[%s779 + $0xc2] sm:$0xff]
      %v1348 = vld [vmem:[%s779 + $0xca] sm:$0xff]
      %v1349 = vld [vmem:[%s779 + $0xda] sm:$0xff]
      %v1350 = vld [vmem:[%s779 + $0xe2] sm:$0xff]
      %v1351 = vld [vmem:[%s779 + $0xf2] sm:$0xff]
      %v1352 = vld [vmem:[%s779 + $0xfa] sm:$0xff]
      %v1353 = vld [vmem:[%s779 + $0x10a] sm:$0xff]
      %v1354 = vld [vmem:[%s779 + $0x112] sm:$0xff]
      %v1355 = vld [vmem:[%s779 + $0x122] sm:$0xff]
      %v1356 = vld [vmem:[%s779 + $0x12a] sm:$0xff]
      %v1357 = vld [vmem:[%s779 + $0x13a] sm:$0xff]
      %v1358 = vld [vmem:[%s779 + $0x142] sm:$0xff]
      %v1359 = vld [vmem:[%s779 + $0x152] sm:$0xff]
      %v1360 = vld [vmem:[%s779 + $0x15a] sm:$0xff]
      %v1361 = vld [vmem:[%s779 + $0x16a] sm:$0xff]
      %v1362 = vld [vmem:[%s779 + $0x172] sm:$0xff]
      %s1363 = scalar_lea.vmem %s4, 5
      %v1364 = vld [vmem:[%s1363] sm:$0x1]
      %v1366 = vlaneseq
      %v1367 = vshrl.u32 %v1366, 7
      %v1368 = vsub.s32 0, %v1367
      %v1369 = vrot.slane %v1364, %v1368
      %v1371 = vmul.f32 %v1331, %v1369
      %v1372 = vmul.f32 %v1332, %v1369
      %v1373 = vmul.f32 %v1333, %v1369
      %v1374 = vmul.f32 %v1334, %v1369
      %v1375 = vmul.f32 %v1335, %v1369
      %v1376 = vmul.f32 %v1336, %v1369
      %v1377 = vmul.f32 %v1337, %v1369
      %v1378 = vmul.f32 %v1338, %v1369
      %v1379 = vmul.f32 %v1339, %v1369
      %v1380 = vmul.f32 %v1340, %v1369
      %v1381 = vmul.f32 %v1341, %v1369
      %v1382 = vmul.f32 %v1342, %v1369
      %v1383 = vmul.f32 %v1343, %v1369
      %v1384 = vmul.f32 %v1344, %v1369
      %v1385 = vmul.f32 %v1345, %v1369
      %v1386 = vmul.f32 %v1346, %v1369
      %v1387 = vmul.f32 %v1347, %v1369
      %v1388 = vmul.f32 %v1348, %v1369
      %v1389 = vmul.f32 %v1349, %v1369
      %v1390 = vmul.f32 %v1350, %v1369
      %v1391 = vmul.f32 %v1351, %v1369
      %v1392 = vmul.f32 %v1352, %v1369
      %v1393 = vmul.f32 %v1353, %v1369
      %v1394 = vmul.f32 %v1354, %v1369
      %v1395 = vmul.f32 %v1355, %v1369
      %v1396 = vmul.f32 %v1356, %v1369
      %v1397 = vmul.f32 %v1357, %v1369
      %v1398 = vmul.f32 %v1358, %v1369
      %v1399 = vmul.f32 %v1359, %v1369
      %v1400 = vmul.f32 %v1360, %v1369
      %v1401 = vmul.f32 %v1361, %v1369
      %v1402 = vmul.f32 %v1362, %v1369
      %v1403 = vadd.f32 %v1299, %v1371
      %v1404 = vadd.f32 %v1300, %v1372
      %v1405 = vadd.f32 %v1301, %v1373
      %v1406 = vadd.f32 %v1302, %v1374
      %v1407 = vadd.f32 %v1303, %v1375
      %v1408 = vadd.f32 %v1304, %v1376
      %v1409 = vadd.f32 %v1305, %v1377
      %v1410 = vadd.f32 %v1306, %v1378
      %v1411 = vadd.f32 %v1307, %v1379
      %v1412 = vadd.f32 %v1308, %v1380
      %v1413 = vadd.f32 %v1309, %v1381
      %v1414 = vadd.f32 %v1310, %v1382
      %v1415 = vadd.f32 %v1311, %v1383
      %v1416 = vadd.f32 %v1312, %v1384
      %v1417 = vadd.f32 %v1313, %v1385
      %v1418 = vadd.f32 %v1314, %v1386
      %v1419 = vadd.f32 %v1315, %v1387
      %v1420 = vadd.f32 %v1316, %v1388
      %v1421 = vadd.f32 %v1317, %v1389
      %v1422 = vadd.f32 %v1318, %v1390
      %v1423 = vadd.f32 %v1319, %v1391
      %v1424 = vadd.f32 %v1320, %v1392
      %v1425 = vadd.f32 %v1321, %v1393
      %v1426 = vadd.f32 %v1322, %v1394
      %v1427 = vadd.f32 %v1323, %v1395
      %v1428 = vadd.f32 %v1324, %v1396
      %v1429 = vadd.f32 %v1325, %v1397
      %v1430 = vadd.f32 %v1326, %v1398
      %v1431 = vadd.f32 %v1327, %v1399
      %v1432 = vadd.f32 %v1328, %v1400
      %v1433 = vadd.f32 %v1329, %v1401
      %v1434 = vadd.f32 %v1330, %v1402
      %s1435 = scalar_lea.vmem [#allocation2], 48
      %v1436 = vld [vmem:[%s1435] sm:$0xff]
      %v1437 = vld [vmem:[%s1435 + $0x8] sm:$0xff]
      %v1438 = vld [vmem:[%s1435 + $0x18] sm:$0xff]
      %v1439 = vld [vmem:[%s1435 + $0x20] sm:$0xff]
      %v1440 = vld [vmem:[%s1435 + $0x30] sm:$0xff]
      %v1441 = vld [vmem:[%s1435 + $0x38] sm:$0xff]
      %v1442 = vld [vmem:[%s1435 + $0x48] sm:$0xff]
      %v1443 = vld [vmem:[%s1435 + $0x50] sm:$0xff]
      %v1444 = vld [vmem:[%s1435 + $0x60] sm:$0xff]
      %v1445 = vld [vmem:[%s1435 + $0x68] sm:$0xff]
      %v1446 = vld [vmem:[%s1435 + $0x78] sm:$0xff]
      %v1447 = vld [vmem:[%s1435 + $0x80] sm:$0xff]
      %v1448 = vld [vmem:[%s1435 + $0x90] sm:$0xff]
      %v1449 = vld [vmem:[%s1435 + $0x98] sm:$0xff]
      %v1450 = vld [vmem:[%s1435 + $0xa8] sm:$0xff]
      %v1451 = vld [vmem:[%s1435 + $0xb0] sm:$0xff]
      %v1452 = vld [vmem:[%s1435 + $0xc0] sm:$0xff]
      %v1453 = vld [vmem:[%s1435 + $0xc8] sm:$0xff]
      %v1454 = vld [vmem:[%s1435 + $0xd8] sm:$0xff]
      %v1455 = vld [vmem:[%s1435 + $0xe0] sm:$0xff]
      %v1456 = vld [vmem:[%s1435 + $0xf0] sm:$0xff]
      %v1457 = vld [vmem:[%s1435 + $0xf8] sm:$0xff]
      %v1458 = vld [vmem:[%s1435 + $0x108] sm:$0xff]
      %v1459 = vld [vmem:[%s1435 + $0x110] sm:$0xff]
      %v1460 = vld [vmem:[%s1435 + $0x120] sm:$0xff]
      %v1461 = vld [vmem:[%s1435 + $0x128] sm:$0xff]
      %v1462 = vld [vmem:[%s1435 + $0x138] sm:$0xff]
      %v1463 = vld [vmem:[%s1435 + $0x140] sm:$0xff]
      %v1464 = vld [vmem:[%s1435 + $0x150] sm:$0xff]
      %v1465 = vld [vmem:[%s1435 + $0x158] sm:$0xff]
      %v1466 = vld [vmem:[%s1435 + $0x168] sm:$0xff]
      %v1467 = vld [vmem:[%s1435 + $0x170] sm:$0xff]
      %s1468 = scalar_lea.vmem %s4, 6
      %v1469 = vld [vmem:[%s1468] sm:$0x1]
      %v1471 = vlaneseq
      %v1472 = vshrl.u32 %v1471, 7
      %v1473 = vsub.s32 0, %v1472
      %v1474 = vrot.slane %v1469, %v1473
      %v1476 = vmul.f32 %v1436, %v1474
      %v1477 = vmul.f32 %v1437, %v1474
      %v1478 = vmul.f32 %v1438, %v1474
      %v1479 = vmul.f32 %v1439, %v1474
      %v1480 = vmul.f32 %v1440, %v1474
      %v1481 = vmul.f32 %v1441, %v1474
      %v1482 = vmul.f32 %v1442, %v1474
      %v1483 = vmul.f32 %v1443, %v1474
      %v1484 = vmul.f32 %v1444, %v1474
      %v1485 = vmul.f32 %v1445, %v1474
      %v1486 = vmul.f32 %v1446, %v1474
      %v1487 = vmul.f32 %v1447, %v1474
      %v1488 = vmul.f32 %v1448, %v1474
      %v1489 = vmul.f32 %v1449, %v1474
      %v1490 = vmul.f32 %v1450, %v1474
      %v1491 = vmul.f32 %v1451, %v1474
      %v1492 = vmul.f32 %v1452, %v1474
      %v1493 = vmul.f32 %v1453, %v1474
      %v1494 = vmul.f32 %v1454, %v1474
      %v1495 = vmul.f32 %v1455, %v1474
      %v1496 = vmul.f32 %v1456, %v1474
      %v1497 = vmul.f32 %v1457, %v1474
      %v1498 = vmul.f32 %v1458, %v1474
      %v1499 = vmul.f32 %v1459, %v1474
      %v1500 = vmul.f32 %v1460, %v1474
      %v1501 = vmul.f32 %v1461, %v1474
      %v1502 = vmul.f32 %v1462, %v1474
      %v1503 = vmul.f32 %v1463, %v1474
      %v1504 = vmul.f32 %v1464, %v1474
      %v1505 = vmul.f32 %v1465, %v1474
      %v1506 = vmul.f32 %v1466, %v1474
      %v1507 = vmul.f32 %v1467, %v1474
      %v1508 = vadd.f32 %v1403, %v1476
      %v1509 = vadd.f32 %v1404, %v1477
      %v1510 = vadd.f32 %v1405, %v1478
      %v1511 = vadd.f32 %v1406, %v1479
      %v1512 = vadd.f32 %v1407, %v1480
      %v1513 = vadd.f32 %v1408, %v1481
      %v1514 = vadd.f32 %v1409, %v1482
      %v1515 = vadd.f32 %v1410, %v1483
      %v1516 = vadd.f32 %v1411, %v1484
      %v1517 = vadd.f32 %v1412, %v1485
      %v1518 = vadd.f32 %v1413, %v1486
      %v1519 = vadd.f32 %v1414, %v1487
      %v1520 = vadd.f32 %v1415, %v1488
      %v1521 = vadd.f32 %v1416, %v1489
      %v1522 = vadd.f32 %v1417, %v1490
      %v1523 = vadd.f32 %v1418, %v1491
      %v1524 = vadd.f32 %v1419, %v1492
      %v1525 = vadd.f32 %v1420, %v1493
      %v1526 = vadd.f32 %v1421, %v1494
      %v1527 = vadd.f32 %v1422, %v1495
      %v1528 = vadd.f32 %v1423, %v1496
      %v1529 = vadd.f32 %v1424, %v1497
      %v1530 = vadd.f32 %v1425, %v1498
      %v1531 = vadd.f32 %v1426, %v1499
      %v1532 = vadd.f32 %v1427, %v1500
      %v1533 = vadd.f32 %v1428, %v1501
      %v1534 = vadd.f32 %v1429, %v1502
      %v1535 = vadd.f32 %v1430, %v1503
      %v1536 = vadd.f32 %v1431, %v1504
      %v1537 = vadd.f32 %v1432, %v1505
      %v1538 = vadd.f32 %v1433, %v1506
      %v1539 = vadd.f32 %v1434, %v1507
      %v1540 = vld [vmem:[%s1435 + $0x1] sm:$0xff]
      %v1541 = vld [vmem:[%s1435 + $0x9] sm:$0xff]
      %v1542 = vld [vmem:[%s1435 + $0x19] sm:$0xff]
      %v1543 = vld [vmem:[%s1435 + $0x21] sm:$0xff]
      %v1544 = vld [vmem:[%s1435 + $0x31] sm:$0xff]
      %v1545 = vld [vmem:[%s1435 + $0x39] sm:$0xff]
      %v1546 = vld [vmem:[%s1435 + $0x49] sm:$0xff]
      %v1547 = vld [vmem:[%s1435 + $0x51] sm:$0xff]
      %v1548 = vld [vmem:[%s1435 + $0x61] sm:$0xff]
      %v1549 = vld [vmem:[%s1435 + $0x69] sm:$0xff]
      %v1550 = vld [vmem:[%s1435 + $0x79] sm:$0xff]
      %v1551 = vld [vmem:[%s1435 + $0x81] sm:$0xff]
      %v1552 = vld [vmem:[%s1435 + $0x91] sm:$0xff]
      %v1553 = vld [vmem:[%s1435 + $0x99] sm:$0xff]
      %v1554 = vld [vmem:[%s1435 + $0xa9] sm:$0xff]
      %v1555 = vld [vmem:[%s1435 + $0xb1] sm:$0xff]
      %v1556 = vld [vmem:[%s1435 + $0xc1] sm:$0xff]
      %v1557 = vld [vmem:[%s1435 + $0xc9] sm:$0xff]
      %v1558 = vld [vmem:[%s1435 + $0xd9] sm:$0xff]
      %v1559 = vld [vmem:[%s1435 + $0xe1] sm:$0xff]
      %v1560 = vld [vmem:[%s1435 + $0xf1] sm:$0xff]
      %v1561 = vld [vmem:[%s1435 + $0xf9] sm:$0xff]
      %v1562 = vld [vmem:[%s1435 + $0x109] sm:$0xff]
      %v1563 = vld [vmem:[%s1435 + $0x111] sm:$0xff]
      %v1564 = vld [vmem:[%s1435 + $0x121] sm:$0xff]
      %v1565 = vld [vmem:[%s1435 + $0x129] sm:$0xff]
      %v1566 = vld [vmem:[%s1435 + $0x139] sm:$0xff]
      %v1567 = vld [vmem:[%s1435 + $0x141] sm:$0xff]
      %v1568 = vld [vmem:[%s1435 + $0x151] sm:$0xff]
      %v1569 = vld [vmem:[%s1435 + $0x159] sm:$0xff]
      %v1570 = vld [vmem:[%s1435 + $0x169] sm:$0xff]
      %v1571 = vld [vmem:[%s1435 + $0x171] sm:$0xff]
      %s1572 = scalar_lea.vmem %s4, 7
      %v1573 = vld [vmem:[%s1572] sm:$0x1]
      %v1575 = vlaneseq
      %v1576 = vshrl.u32 %v1575, 7
      %v1577 = vsub.s32 0, %v1576
      %v1578 = vrot.slane %v1573, %v1577
      %v1580 = vmul.f32 %v1540, %v1578
      %v1581 = vmul.f32 %v1541, %v1578
      %v1582 = vmul.f32 %v1542, %v1578
      %v1583 = vmul.f32 %v1543, %v1578
      %v1584 = vmul.f32 %v1544, %v1578
      %v1585 = vmul.f32 %v1545, %v1578
      %v1586 = vmul.f32 %v1546, %v1578
      %v1587 = vmul.f32 %v1547, %v1578
      %v1588 = vmul.f32 %v1548, %v1578
      %v1589 = vmul.f32 %v1549, %v1578
      %v1590 = vmul.f32 %v1550, %v1578
      %v1591 = vmul.f32 %v1551, %v1578
      %v1592 = vmul.f32 %v1552, %v1578
      %v1593 = vmul.f32 %v1553, %v1578
      %v1594 = vmul.f32 %v1554, %v1578
      %v1595 = vmul.f32 %v1555, %v1578
      %v1596 = vmul.f32 %v1556, %v1578
      %v1597 = vmul.f32 %v1557, %v1578
      %v1598 = vmul.f32 %v1558, %v1578
      %v1599 = vmul.f32 %v1559, %v1578
      %v1600 = vmul.f32 %v1560, %v1578
      %v1601 = vmul.f32 %v1561, %v1578
      %v1602 = vmul.f32 %v1562, %v1578
      %v1603 = vmul.f32 %v1563, %v1578
      %v1604 = vmul.f32 %v1564, %v1578
      %v1605 = vmul.f32 %v1565, %v1578
      %v1606 = vmul.f32 %v1566, %v1578
      %v1607 = vmul.f32 %v1567, %v1578
      %v1608 = vmul.f32 %v1568, %v1578
      %v1609 = vmul.f32 %v1569, %v1578
      %v1610 = vmul.f32 %v1570, %v1578
      %v1611 = vmul.f32 %v1571, %v1578
      %v1612 = vadd.f32 %v1508, %v1580
      %v1613 = vadd.f32 %v1509, %v1581
      %v1614 = vadd.f32 %v1510, %v1582
      %v1615 = vadd.f32 %v1511, %v1583
      %v1616 = vadd.f32 %v1512, %v1584
      %v1617 = vadd.f32 %v1513, %v1585
      %v1618 = vadd.f32 %v1514, %v1586
      %v1619 = vadd.f32 %v1515, %v1587
      %v1620 = vadd.f32 %v1516, %v1588
      %v1621 = vadd.f32 %v1517, %v1589
      %v1622 = vadd.f32 %v1518, %v1590
      %v1623 = vadd.f32 %v1519, %v1591
      %v1624 = vadd.f32 %v1520, %v1592
      %v1625 = vadd.f32 %v1521, %v1593
      %v1626 = vadd.f32 %v1522, %v1594
      %v1627 = vadd.f32 %v1523, %v1595
      %v1628 = vadd.f32 %v1524, %v1596
      %v1629 = vadd.f32 %v1525, %v1597
      %v1630 = vadd.f32 %v1526, %v1598
      %v1631 = vadd.f32 %v1527, %v1599
      %v1632 = vadd.f32 %v1528, %v1600
      %v1633 = vadd.f32 %v1529, %v1601
      %v1634 = vadd.f32 %v1530, %v1602
      %v1635 = vadd.f32 %v1531, %v1603
      %v1636 = vadd.f32 %v1532, %v1604
      %v1637 = vadd.f32 %v1533, %v1605
      %v1638 = vadd.f32 %v1534, %v1606
      %v1639 = vadd.f32 %v1535, %v1607
      %v1640 = vadd.f32 %v1536, %v1608
      %v1641 = vadd.f32 %v1537, %v1609
      %v1642 = vadd.f32 %v1538, %v1610
      %v1643 = vadd.f32 %v1539, %v1611
      %v1644 = vld [vmem:[%s1435 + $0x2] sm:$0xff]
      %v1645 = vld [vmem:[%s1435 + $0xa] sm:$0xff]
      %v1646 = vld [vmem:[%s1435 + $0x1a] sm:$0xff]
      %v1647 = vld [vmem:[%s1435 + $0x22] sm:$0xff]
      %v1648 = vld [vmem:[%s1435 + $0x32] sm:$0xff]
      %v1649 = vld [vmem:[%s1435 + $0x3a] sm:$0xff]
      %v1650 = vld [vmem:[%s1435 + $0x4a] sm:$0xff]
      %v1651 = vld [vmem:[%s1435 + $0x52] sm:$0xff]
      %v1652 = vld [vmem:[%s1435 + $0x62] sm:$0xff]
      %v1653 = vld [vmem:[%s1435 + $0x6a] sm:$0xff]
      %v1654 = vld [vmem:[%s1435 + $0x7a] sm:$0xff]
      %v1655 = vld [vmem:[%s1435 + $0x82] sm:$0xff]
      %v1656 = vld [vmem:[%s1435 + $0x92] sm:$0xff]
      %v1657 = vld [vmem:[%s1435 + $0x9a] sm:$0xff]
      %v1658 = vld [vmem:[%s1435 + $0xaa] sm:$0xff]
      %v1659 = vld [vmem:[%s1435 + $0xb2] sm:$0xff]
      %v1660 = vld [vmem:[%s1435 + $0xc2] sm:$0xff]
      %v1661 = vld [vmem:[%s1435 + $0xca] sm:$0xff]
      %v1662 = vld [vmem:[%s1435 + $0xda] sm:$0xff]
      %v1663 = vld [vmem:[%s1435 + $0xe2] sm:$0xff]
      %v1664 = vld [vmem:[%s1435 + $0xf2] sm:$0xff]
      %v1665 = vld [vmem:[%s1435 + $0xfa] sm:$0xff]
      %v1666 = vld [vmem:[%s1435 + $0x10a] sm:$0xff]
      %v1667 = vld [vmem:[%s1435 + $0x112] sm:$0xff]
      %v1668 = vld [vmem:[%s1435 + $0x122] sm:$0xff]
      %v1669 = vld [vmem:[%s1435 + $0x12a] sm:$0xff]
      %v1670 = vld [vmem:[%s1435 + $0x13a] sm:$0xff]
      %v1671 = vld [vmem:[%s1435 + $0x142] sm:$0xff]
      %v1672 = vld [vmem:[%s1435 + $0x152] sm:$0xff]
      %v1673 = vld [vmem:[%s1435 + $0x15a] sm:$0xff]
      %v1674 = vld [vmem:[%s1435 + $0x16a] sm:$0xff]
      %v1675 = vld [vmem:[%s1435 + $0x172] sm:$0xff]
      %s1676 = scalar_lea.vmem %s4, 8
      %v1677 = vld [vmem:[%s1676] sm:$0x1]
      %v1679 = vlaneseq
      %v1680 = vshrl.u32 %v1679, 7
      %v1681 = vsub.s32 0, %v1680
      %v1682 = vrot.slane %v1677, %v1681
      %v1684 = vmul.f32 %v1644, %v1682
      %v1685 = vmul.f32 %v1645, %v1682
      %v1686 = vmul.f32 %v1646, %v1682
      %v1687 = vmul.f32 %v1647, %v1682
      %v1688 = vmul.f32 %v1648, %v1682
      %v1689 = vmul.f32 %v1649, %v1682
      %v1690 = vmul.f32 %v1650, %v1682
      %v1691 = vmul.f32 %v1651, %v1682
      %v1692 = vmul.f32 %v1652, %v1682
      %v1693 = vmul.f32 %v1653, %v1682
      %v1694 = vmul.f32 %v1654, %v1682
      %v1695 = vmul.f32 %v1655, %v1682
      %v1696 = vmul.f32 %v1656, %v1682
      %v1697 = vmul.f32 %v1657, %v1682
      %v1698 = vmul.f32 %v1658, %v1682
      %v1699 = vmul.f32 %v1659, %v1682
      %v1700 = vmul.f32 %v1660, %v1682
      %v1701 = vmul.f32 %v1661, %v1682
      %v1702 = vmul.f32 %v1662, %v1682
      %v1703 = vmul.f32 %v1663, %v1682
      %v1704 = vmul.f32 %v1664, %v1682
      %v1705 = vmul.f32 %v1665, %v1682
      %v1706 = vmul.f32 %v1666, %v1682
      %v1707 = vmul.f32 %v1667, %v1682
      %v1708 = vmul.f32 %v1668, %v1682
      %v1709 = vmul.f32 %v1669, %v1682
      %v1710 = vmul.f32 %v1670, %v1682
      %v1711 = vmul.f32 %v1671, %v1682
      %v1712 = vmul.f32 %v1672, %v1682
      %v1713 = vmul.f32 %v1673, %v1682
      %v1714 = vmul.f32 %v1674, %v1682
      %v1715 = vmul.f32 %v1675, %v1682
      %v1716 = vadd.f32 %v1612, %v1684
      %v1717 = vadd.f32 %v1613, %v1685
      %v1718 = vadd.f32 %v1614, %v1686
      %v1719 = vadd.f32 %v1615, %v1687
      %v1720 = vadd.f32 %v1616, %v1688
      %v1721 = vadd.f32 %v1617, %v1689
      %v1722 = vadd.f32 %v1618, %v1690
      %v1723 = vadd.f32 %v1619, %v1691
      %v1724 = vadd.f32 %v1620, %v1692
      %v1725 = vadd.f32 %v1621, %v1693
      %v1726 = vadd.f32 %v1622, %v1694
      %v1727 = vadd.f32 %v1623, %v1695
      %v1728 = vadd.f32 %v1624, %v1696
      %v1729 = vadd.f32 %v1625, %v1697
      %v1730 = vadd.f32 %v1626, %v1698
      %v1731 = vadd.f32 %v1627, %v1699
      %v1732 = vadd.f32 %v1628, %v1700
      %v1733 = vadd.f32 %v1629, %v1701
      %v1734 = vadd.f32 %v1630, %v1702
      %v1735 = vadd.f32 %v1631, %v1703
      %v1736 = vadd.f32 %v1632, %v1704
      %v1737 = vadd.f32 %v1633, %v1705
      %v1738 = vadd.f32 %v1634, %v1706
      %v1739 = vadd.f32 %v1635, %v1707
      %v1740 = vadd.f32 %v1636, %v1708
      %v1741 = vadd.f32 %v1637, %v1709
      %v1742 = vadd.f32 %v1638, %v1710
      %v1743 = vadd.f32 %v1639, %v1711
      %v1744 = vadd.f32 %v1640, %v1712
      %v1745 = vadd.f32 %v1641, %v1713
      %v1746 = vadd.f32 %v1642, %v1714
      %v1747 = vadd.f32 %v1643, %v1715
      %v1748 = vld [vmem:[%s5] sm:$0x1]
      %v1750 = vlaneseq
      %v1751 = vshrl.u32 %v1750, 7
      %v1752 = vsub.s32 0, %v1751
      %v1753 = vrot.slane %v1748, %v1752
      %v1755 = vmul.f32 %v1716, %v1753
      %v1756 = vmul.f32 %v1717, %v1753
      %v1757 = vmul.f32 %v1718, %v1753
      %v1758 = vmul.f32 %v1719, %v1753
      %v1759 = vmul.f32 %v1720, %v1753
      %v1760 = vmul.f32 %v1721, %v1753
      %v1761 = vmul.f32 %v1722, %v1753
      %v1762 = vmul.f32 %v1723, %v1753
      %v1763 = vmul.f32 %v1724, %v1753
      %v1764 = vmul.f32 %v1725, %v1753
      %v1765 = vmul.f32 %v1726, %v1753
      %v1766 = vmul.f32 %v1727, %v1753
      %v1767 = vmul.f32 %v1728, %v1753
      %v1768 = vmul.f32 %v1729, %v1753
      %v1769 = vmul.f32 %v1730, %v1753
      %v1770 = vmul.f32 %v1731, %v1753
      %v1771 = vmul.f32 %v1732, %v1753
      %v1772 = vmul.f32 %v1733, %v1753
      %v1773 = vmul.f32 %v1734, %v1753
      %v1774 = vmul.f32 %v1735, %v1753
      %v1775 = vmul.f32 %v1736, %v1753
      %v1776 = vmul.f32 %v1737, %v1753
      %v1777 = vmul.f32 %v1738, %v1753
      %v1778 = vmul.f32 %v1739, %v1753
      %v1779 = vmul.f32 %v1740, %v1753
      %v1780 = vmul.f32 %v1741, %v1753
      %v1781 = vmul.f32 %v1742, %v1753
      %v1782 = vmul.f32 %v1743, %v1753
      %v1783 = vmul.f32 %v1744, %v1753
      %v1784 = vmul.f32 %v1745, %v1753
      %v1785 = vmul.f32 %v1746, %v1753
      %v1786 = vmul.f32 %v1747, %v1753
      %v1787 = vld [vmem:[%s6] sm:$0x1]
      %v1789 = vlaneseq
      %v1790 = vshrl.u32 %v1789, 7
      %v1791 = vsub.s32 0, %v1790
      %v1792 = vrot.slane %v1787, %v1791
      %v1794 = vadd.f32 %v1755, %v1792
      %v1795 = vadd.f32 %v1756, %v1792
      %v1796 = vadd.f32 %v1757, %v1792
      %v1797 = vadd.f32 %v1758, %v1792
      %v1798 = vadd.f32 %v1759, %v1792
      %v1799 = vadd.f32 %v1760, %v1792
      %v1800 = vadd.f32 %v1761, %v1792
      %v1801 = vadd.f32 %v1762, %v1792
      %v1802 = vadd.f32 %v1763, %v1792
      %v1803 = vadd.f32 %v1764, %v1792
      %v1804 = vadd.f32 %v1765, %v1792
      %v1805 = vadd.f32 %v1766, %v1792
      %v1806 = vadd.f32 %v1767, %v1792
      %v1807 = vadd.f32 %v1768, %v1792
      %v1808 = vadd.f32 %v1769, %v1792
      %v1809 = vadd.f32 %v1770, %v1792
      %v1810 = vadd.f32 %v1771, %v1792
      %v1811 = vadd.f32 %v1772, %v1792
      %v1812 = vadd.f32 %v1773, %v1792
      %v1813 = vadd.f32 %v1774, %v1792
      %v1814 = vadd.f32 %v1775, %v1792
      %v1815 = vadd.f32 %v1776, %v1792
      %v1816 = vadd.f32 %v1777, %v1792
      %v1817 = vadd.f32 %v1778, %v1792
      %v1818 = vadd.f32 %v1779, %v1792
      %v1819 = vadd.f32 %v1780, %v1792
      %v1820 = vadd.f32 %v1781, %v1792
      %v1821 = vadd.f32 %v1782, %v1792
      %v1822 = vadd.f32 %v1783, %v1792
      %v1823 = vadd.f32 %v1784, %v1792
      %v1824 = vadd.f32 %v1785, %v1792
      %v1825 = vadd.f32 %v1786, %v1792
      %v1826 = vpack.c.bf16 %v1795, %v1794
      %v1827 = vpack.c.bf16 %v1797, %v1796
      %v1828 = vpack.c.bf16 %v1799, %v1798
      %v1829 = vpack.c.bf16 %v1801, %v1800
      %v1830 = vpack.c.bf16 %v1803, %v1802
      %v1831 = vpack.c.bf16 %v1805, %v1804
      %v1832 = vpack.c.bf16 %v1807, %v1806
      %v1833 = vpack.c.bf16 %v1809, %v1808
      %v1834 = vpack.c.bf16 %v1811, %v1810
      %v1835 = vpack.c.bf16 %v1813, %v1812
      %v1836 = vpack.c.bf16 %v1815, %v1814
      %v1837 = vpack.c.bf16 %v1817, %v1816
      %v1838 = vpack.c.bf16 %v1819, %v1818
      %v1839 = vpack.c.bf16 %v1821, %v1820
      %v1840 = vpack.c.bf16 %v1823, %v1822
      %v1841 = vpack.c.bf16 %v1825, %v1824
      %v1842 = vld [vmem:[%s7] sm:$0xf]
      %v1844 = vsel %vm410, %v1826, 0
      %v1847 = vsel %vm410, %v1827, 0
      %v1850 = vsel %vm410, %v1828, 0
      %v1853 = vsel %vm410, %v1829, 0
      %v1856 = vsel %vm410, %v1830, 0
      %v1859 = vsel %vm410, %v1831, 0
      %v1862 = vsel %vm410, %v1832, 0
      %v1865 = vsel %vm410, %v1833, 0
      %v1868 = vsel %vm410, %v1834, 0
      %v1871 = vsel %vm410, %v1835, 0
      %v1874 = vsel %vm410, %v1836, 0
      %v1877 = vsel %vm410, %v1837, 0
      %v1880 = vsel %vm410, %v1838, 0
      %v1883 = vsel %vm410, %v1839, 0
      %v1886 = vsel %vm410, %v1840, 0
      %v1889 = vsel %vm410, %v1841, 0
      %v1892 = vsel %vm459, %v1842, 0
      %1894 = vmatprep.subr.bf16.mxu0 0
      %1895 = vmatpush1.bf16.msra.mxu0 0
      %1896 = vmatprep.subr.bf16.mxu0 0
      %1897 = vmatpush1.bf16.msra.mxu0 0
      %1898 = vmatprep.subr.bf16.mxu0 0
      %1899 = vmatpush1.bf16.msra.mxu0 0
      %1900 = vmatprep.subr.bf16.mxu0 0
      %1901 = vmatpush1.bf16.msra.mxu0 0
      %1902 = vmatprep.subr.bf16.mxu0 0
      %1903 = vmatpush1.bf16.msra.mxu0 0
      %1904 = vmatprep.subr.bf16.mxu0 0
      %1905 = vmatpush1.bf16.msra.mxu0 0
      %1906 = vmatprep.subr.bf16.mxu0 0
      %1907 = vmatpush1.bf16.msra.mxu0 0
      %1908 = vmatprep.subr.bf16.mxu0 0
      %1909 = vmatpush1.bf16.msra.mxu0 %v1892
      %1910 = vmatprep.subr.bf16.mxu0 0
      %1911 = vmatpush2.bf16.msra.mxu0 0
      %1912 = vmatprep.subr.bf16.mxu0 0
      %1913 = vmatpush2.bf16.msra.mxu0 0
      %1914 = vmatprep.subr.bf16.mxu0 0
      %1915 = vmatpush2.bf16.msra.mxu0 0
      %1916 = vmatprep.subr.bf16.mxu0 0
      %1917 = vmatpush2.bf16.msra.mxu0 0
      %1918 = vmatprep.subr.bf16.mxu0 0
      %1919 = vmatpush2.bf16.msra.mxu0 0
      %1920 = vmatprep.subr.bf16.mxu0 0
      %1921 = vmatpush2.bf16.msra.mxu0 0
      %1922 = vmatprep.subr.bf16.mxu0 0
      %1923 = vmatpush2.bf16.msra.mxu0 0
      %1924 = vmatprep.subr.bf16.mxu0 0
      %1925 = vmatpush2.bf16.msra.mxu0 0
      %1926 = vmatprep.mubr.bf16.mxu0 0
      %1927 = vmatmul.mubr.bf16.gmra.mxu0 %v1844
      %v1928 = vpop.f32.mrf.mxu0
      %v1929 = vadd.f32 0.0, %v1928
      %v1930 = vpop.f32.mrf.mxu0
      %v1931 = vpop.f32.mrf.mxu0
      %v1932 = vadd.f32 0.0, %v1931
      %v1933 = vpop.f32.mrf.mxu0
      %1934 = vmatprep.mubr.bf16.mxu0 0
      %1935 = vmatmul.mubr.bf16.gmra.mxu0 %v1847
      %v1936 = vpop.f32.mrf.mxu0
      %v1937 = vadd.f32 0.0, %v1936
      %v1938 = vpop.f32.mrf.mxu0
      %v1939 = vpop.f32.mrf.mxu0
      %v1940 = vadd.f32 0.0, %v1939
      %v1941 = vpop.f32.mrf.mxu0
      %1942 = vmatprep.mubr.bf16.mxu0 0
      %1943 = vmatmul.mubr.bf16.gmra.mxu0 %v1850
      %v1944 = vpop.f32.mrf.mxu0
      %v1945 = vadd.f32 0.0, %v1944
      %v1946 = vpop.f32.mrf.mxu0
      %v1947 = vpop.f32.mrf.mxu0
      %v1948 = vadd.f32 0.0, %v1947
      %v1949 = vpop.f32.mrf.mxu0
      %1950 = vmatprep.mubr.bf16.mxu0 0
      %1951 = vmatmul.mubr.bf16.gmra.mxu0 %v1853
      %v1952 = vpop.f32.mrf.mxu0
      %v1953 = vadd.f32 0.0, %v1952
      %v1954 = vpop.f32.mrf.mxu0
      %v1955 = vpop.f32.mrf.mxu0
      %v1956 = vadd.f32 0.0, %v1955
      %v1957 = vpop.f32.mrf.mxu0
      %1958 = vmatprep.mubr.bf16.mxu0 0
      %1959 = vmatmul.mubr.bf16.gmra.mxu0 %v1856
      %v1960 = vpop.f32.mrf.mxu0
      %v1961 = vadd.f32 0.0, %v1960
      %v1962 = vpop.f32.mrf.mxu0
      %v1963 = vpop.f32.mrf.mxu0
      %v1964 = vadd.f32 0.0, %v1963
      %v1965 = vpop.f32.mrf.mxu0
      %1966 = vmatprep.mubr.bf16.mxu0 0
      %1967 = vmatmul.mubr.bf16.gmra.mxu0 %v1859
      %v1968 = vpop.f32.mrf.mxu0
      %v1969 = vadd.f32 0.0, %v1968
      %v1970 = vpop.f32.mrf.mxu0
      %v1971 = vpop.f32.mrf.mxu0
      %v1972 = vadd.f32 0.0, %v1971
      %v1973 = vpop.f32.mrf.mxu0
      %1974 = vmatprep.mubr.bf16.mxu0 0
      %1975 = vmatmul.mubr.bf16.gmra.mxu0 %v1862
      %v1976 = vpop.f32.mrf.mxu0
      %v1977 = vadd.f32 0.0, %v1976
      %v1978 = vpop.f32.mrf.mxu0
      %v1979 = vpop.f32.mrf.mxu0
      %v1980 = vadd.f32 0.0, %v1979
      %v1981 = vpop.f32.mrf.mxu0
      %1982 = vmatprep.mubr.bf16.mxu0 0
      %1983 = vmatmul.mubr.bf16.gmra.mxu0 %v1865
      %v1984 = vpop.f32.mrf.mxu0
      %v1985 = vadd.f32 0.0, %v1984
      %v1986 = vpop.f32.mrf.mxu0
      %v1987 = vpop.f32.mrf.mxu0
      %v1988 = vadd.f32 0.0, %v1987
      %v1989 = vpop.f32.mrf.mxu0
      %1990 = vmatprep.mubr.bf16.mxu0 0
      %1991 = vmatmul.mubr.bf16.gmra.mxu0 %v1868
      %v1992 = vpop.f32.mrf.mxu0
      %v1993 = vadd.f32 0.0, %v1992
      %v1994 = vpop.f32.mrf.mxu0
      %v1995 = vpop.f32.mrf.mxu0
      %v1996 = vadd.f32 0.0, %v1995
      %v1997 = vpop.f32.mrf.mxu0
      %1998 = vmatprep.mubr.bf16.mxu0 0
      %1999 = vmatmul.mubr.bf16.gmra.mxu0 %v1871
      %v2000 = vpop.f32.mrf.mxu0
      %v2001 = vadd.f32 0.0, %v2000
      %v2002 = vpop.f32.mrf.mxu0
      %v2003 = vpop.f32.mrf.mxu0
      %v2004 = vadd.f32 0.0, %v2003
      %v2005 = vpop.f32.mrf.mxu0
      %2006 = vmatprep.mubr.bf16.mxu0 0
      %2007 = vmatmul.mubr.bf16.gmra.mxu0 %v1874
      %v2008 = vpop.f32.mrf.mxu0
      %v2009 = vadd.f32 0.0, %v2008
      %v2010 = vpop.f32.mrf.mxu0
      %v2011 = vpop.f32.mrf.mxu0
      %v2012 = vadd.f32 0.0, %v2011
      %v2013 = vpop.f32.mrf.mxu0
      %2014 = vmatprep.mubr.bf16.mxu0 0
      %2015 = vmatmul.mubr.bf16.gmra.mxu0 %v1877
      %v2016 = vpop.f32.mrf.mxu0
      %v2017 = vadd.f32 0.0, %v2016
      %v2018 = vpop.f32.mrf.mxu0
      %v2019 = vpop.f32.mrf.mxu0
      %v2020 = vadd.f32 0.0, %v2019
      %v2021 = vpop.f32.mrf.mxu0
      %2022 = vmatprep.mubr.bf16.mxu0 0
      %2023 = vmatmul.mubr.bf16.gmra.mxu0 %v1880
      %v2024 = vpop.f32.mrf.mxu0
      %v2025 = vadd.f32 0.0, %v2024
      %v2026 = vpop.f32.mrf.mxu0
      %v2027 = vpop.f32.mrf.mxu0
      %v2028 = vadd.f32 0.0, %v2027
      %v2029 = vpop.f32.mrf.mxu0
      %2030 = vmatprep.mubr.bf16.mxu0 0
      %2031 = vmatmul.mubr.bf16.gmra.mxu0 %v1883
      %v2032 = vpop.f32.mrf.mxu0
      %v2033 = vadd.f32 0.0, %v2032
      %v2034 = vpop.f32.mrf.mxu0
      %v2035 = vpop.f32.mrf.mxu0
      %v2036 = vadd.f32 0.0, %v2035
      %v2037 = vpop.f32.mrf.mxu0
      %2038 = vmatprep.mubr.bf16.mxu0 0
      %2039 = vmatmul.mubr.bf16.gmra.mxu0 %v1886
      %v2040 = vpop.f32.mrf.mxu0
      %v2041 = vadd.f32 0.0, %v2040
      %v2042 = vpop.f32.mrf.mxu0
      %v2043 = vpop.f32.mrf.mxu0
      %v2044 = vadd.f32 0.0, %v2043
      %v2045 = vpop.f32.mrf.mxu0
      %2046 = vmatprep.mubr.bf16.mxu0 0
      %2047 = vmatmul.mubr.bf16.gmra.mxu0 %v1889
      %v2048 = vpop.f32.mrf.mxu0
      %v2049 = vadd.f32 0.0, %v2048
      %v2050 = vpop.f32.mrf.mxu0
      %v2051 = vpop.f32.mrf.mxu0
      %v2052 = vadd.f32 0.0, %v2051
      %v2053 = vpop.f32.mrf.mxu0
      %2054 = vdwg.mxu0
      %v2055 = vld [vmem:[%s8] sm:$0x1]
      %v2057 = vlaneseq
      %v2058 = vshrl.u32 %v2057, 7
      %v2059 = vsub.s32 0, %v2058
      %v2060 = vrot.slane %v2055, %v2059
      %v2062 = vmul.f32 %v1929, %v2060
      %v2063 = vmul.f32 %v1932, %v2060
      %v2064 = vmul.f32 %v1937, %v2060
      %v2065 = vmul.f32 %v1940, %v2060
      %v2066 = vmul.f32 %v1945, %v2060
      %v2067 = vmul.f32 %v1948, %v2060
      %v2068 = vmul.f32 %v1953, %v2060
      %v2069 = vmul.f32 %v1956, %v2060
      %v2070 = vmul.f32 %v1961, %v2060
      %v2071 = vmul.f32 %v1964, %v2060
      %v2072 = vmul.f32 %v1969, %v2060
      %v2073 = vmul.f32 %v1972, %v2060
      %v2074 = vmul.f32 %v1977, %v2060
      %v2075 = vmul.f32 %v1980, %v2060
      %v2076 = vmul.f32 %v1985, %v2060
      %v2077 = vmul.f32 %v1988, %v2060
      %v2078 = vmul.f32 %v1993, %v2060
      %v2079 = vmul.f32 %v1996, %v2060
      %v2080 = vmul.f32 %v2001, %v2060
      %v2081 = vmul.f32 %v2004, %v2060
      %v2082 = vmul.f32 %v2009, %v2060
      %v2083 = vmul.f32 %v2012, %v2060
      %v2084 = vmul.f32 %v2017, %v2060
      %v2085 = vmul.f32 %v2020, %v2060
      %v2086 = vmul.f32 %v2025, %v2060
      %v2087 = vmul.f32 %v2028, %v2060
      %v2088 = vmul.f32 %v2033, %v2060
      %v2089 = vmul.f32 %v2036, %v2060
      %v2090 = vmul.f32 %v2041, %v2060
      %v2091 = vmul.f32 %v2044, %v2060
      %v2092 = vmul.f32 %v2049, %v2060
      %v2093 = vmul.f32 %v2052, %v2060
      %v2094 = vld [vmem:[%s9] sm:$0x1]
      %v2096 = vlaneseq
      %v2097 = vshrl.u32 %v2096, 7
      %v2098 = vsub.s32 0, %v2097
      %v2099 = vrot.slane %v2094, %v2098
      %v2101 = vadd.f32 %v2062, %v2099
      %v2102 = vadd.f32 %v2063, %v2099
      %v2103 = vadd.f32 %v2064, %v2099
      %v2104 = vadd.f32 %v2065, %v2099
      %v2105 = vadd.f32 %v2066, %v2099
      %v2106 = vadd.f32 %v2067, %v2099
      %v2107 = vadd.f32 %v2068, %v2099
      %v2108 = vadd.f32 %v2069, %v2099
      %v2109 = vadd.f32 %v2070, %v2099
      %v2110 = vadd.f32 %v2071, %v2099
      %v2111 = vadd.f32 %v2072, %v2099
      %v2112 = vadd.f32 %v2073, %v2099
      %v2113 = vadd.f32 %v2074, %v2099
      %v2114 = vadd.f32 %v2075, %v2099
      %v2115 = vadd.f32 %v2076, %v2099
      %v2116 = vadd.f32 %v2077, %v2099
      %v2117 = vadd.f32 %v2078, %v2099
      %v2118 = vadd.f32 %v2079, %v2099
      %v2119 = vadd.f32 %v2080, %v2099
      %v2120 = vadd.f32 %v2081, %v2099
      %v2121 = vadd.f32 %v2082, %v2099
      %v2122 = vadd.f32 %v2083, %v2099
      %v2123 = vadd.f32 %v2084, %v2099
      %v2124 = vadd.f32 %v2085, %v2099
      %v2125 = vadd.f32 %v2086, %v2099
      %v2126 = vadd.f32 %v2087, %v2099
      %v2127 = vadd.f32 %v2088, %v2099
      %v2128 = vadd.f32 %v2089, %v2099
      %v2129 = vadd.f32 %v2090, %v2099
      %v2130 = vadd.f32 %v2091, %v2099
      %v2131 = vadd.f32 %v2092, %v2099
      %v2132 = vadd.f32 %v2093, %v2099
      %v2133 = vadd.f32 %v2101, %v361
      %v2134 = vadd.f32 %v2102, %v362
      %v2135 = vadd.f32 %v2103, %v363
      %v2136 = vadd.f32 %v2104, %v364
      %v2137 = vadd.f32 %v2105, %v365
      %v2138 = vadd.f32 %v2106, %v366
      %v2139 = vadd.f32 %v2107, %v367
      %v2140 = vadd.f32 %v2108, %v368
      %v2141 = vadd.f32 %v2109, %v369
      %v2142 = vadd.f32 %v2110, %v370
      %v2143 = vadd.f32 %v2111, %v371
      %v2144 = vadd.f32 %v2112, %v372
      %v2145 = vadd.f32 %v2113, %v373
      %v2146 = vadd.f32 %v2114, %v374
      %v2147 = vadd.f32 %v2115, %v375
      %v2148 = vadd.f32 %v2116, %v376
      %v2149 = vadd.f32 %v2117, %v377
      %v2150 = vadd.f32 %v2118, %v378
      %v2151 = vadd.f32 %v2119, %v379
      %v2152 = vadd.f32 %v2120, %v380
      %v2153 = vadd.f32 %v2121, %v381
      %v2154 = vadd.f32 %v2122, %v382
      %v2155 = vadd.f32 %v2123, %v383
      %v2156 = vadd.f32 %v2124, %v384
      %v2157 = vadd.f32 %v2125, %v385
      %v2158 = vadd.f32 %v2126, %v386
      %v2159 = vadd.f32 %v2127, %v387
      %v2160 = vadd.f32 %v2128, %v388
      %v2161 = vadd.f32 %v2129, %v389
      %v2162 = vadd.f32 %v2130, %v390
      %v2163 = vadd.f32 %v2131, %v391
      %v2164 = vadd.f32 %v2132, %v392
      %v2165 = vmax.f32 %v2133, 0.0
      %v2166 = vmax.f32 %v2134, 0.0
      %v2167 = vmax.f32 %v2135, 0.0
      %v2168 = vmax.f32 %v2136, 0.0
      %v2169 = vmax.f32 %v2137, 0.0
      %v2170 = vmax.f32 %v2138, 0.0
      %v2171 = vmax.f32 %v2139, 0.0
      %v2172 = vmax.f32 %v2140, 0.0
      %v2173 = vmax.f32 %v2141, 0.0
      %v2174 = vmax.f32 %v2142, 0.0
      %v2175 = vmax.f32 %v2143, 0.0
      %v2176 = vmax.f32 %v2144, 0.0
      %v2177 = vmax.f32 %v2145, 0.0
      %v2178 = vmax.f32 %v2146, 0.0
      %v2179 = vmax.f32 %v2147, 0.0
      %v2180 = vmax.f32 %v2148, 0.0
      %v2181 = vmax.f32 %v2149, 0.0
      %v2182 = vmax.f32 %v2150, 0.0
      %v2183 = vmax.f32 %v2151, 0.0
      %v2184 = vmax.f32 %v2152, 0.0
      %v2185 = vmax.f32 %v2153, 0.0
      %v2186 = vmax.f32 %v2154, 0.0
      %v2187 = vmax.f32 %v2155, 0.0
      %v2188 = vmax.f32 %v2156, 0.0
      %v2189 = vmax.f32 %v2157, 0.0
      %v2190 = vmax.f32 %v2158, 0.0
      %v2191 = vmax.f32 %v2159, 0.0
      %v2192 = vmax.f32 %v2160, 0.0
      %v2193 = vmax.f32 %v2161, 0.0
      %v2194 = vmax.f32 %v2162, 0.0
      %v2195 = vmax.f32 %v2163, 0.0
      %v2196 = vmax.f32 %v2164, 0.0
      %2197 = vst.msk [vmem:[%s359] sm:$0xff] %vm410, %v2165
      %2198 = vst.msk [vmem:[%s359 + $0x8] sm:$0xff] %vm410, %v2166
      %2199 = vst.msk [vmem:[%s359 + $0x10] sm:$0xff] %vm410, %v2167
      %2200 = vst.msk [vmem:[%s359 + $0x18] sm:$0xff] %vm410, %v2168
      %2201 = vst.msk [vmem:[%s359 + $0x20] sm:$0xff] %vm410, %v2169
      %2202 = vst.msk [vmem:[%s359 + $0x28] sm:$0xff] %vm410, %v2170
      %2203 = vst.msk [vmem:[%s359 + $0x30] sm:$0xff] %vm410, %v2171
      %2204 = vst.msk [vmem:[%s359 + $0x38] sm:$0xff] %vm410, %v2172
      %2205 = vst.msk [vmem:[%s359 + $0x40] sm:$0xff] %vm410, %v2173
      %2206 = vst.msk [vmem:[%s359 + $0x48] sm:$0xff] %vm410, %v2174
      %2207 = vst.msk [vmem:[%s359 + $0x50] sm:$0xff] %vm410, %v2175
      %2208 = vst.msk [vmem:[%s359 + $0x58] sm:$0xff] %vm410, %v2176
      %2209 = vst.msk [vmem:[%s359 + $0x60] sm:$0xff] %vm410, %v2177
      %2210 = vst.msk [vmem:[%s359 + $0x68] sm:$0xff] %vm410, %v2178
      %2211 = vst.msk [vmem:[%s359 + $0x70] sm:$0xff] %vm410, %v2179
      %2212 = vst.msk [vmem:[%s359 + $0x78] sm:$0xff] %vm410, %v2180
      %2213 = vst.msk [vmem:[%s359 + $0x80] sm:$0xff] %vm410, %v2181
      %2214 = vst.msk [vmem:[%s359 + $0x88] sm:$0xff] %vm410, %v2182
      %2215 = vst.msk [vmem:[%s359 + $0x90] sm:$0xff] %vm410, %v2183
      %2216 = vst.msk [vmem:[%s359 + $0x98] sm:$0xff] %vm410, %v2184
      %2217 = vst.msk [vmem:[%s359 + $0xa0] sm:$0xff] %vm410, %v2185
      %2218 = vst.msk [vmem:[%s359 + $0xa8] sm:$0xff] %vm410, %v2186
      %2219 = vst.msk [vmem:[%s359 + $0xb0] sm:$0xff] %vm410, %v2187
      %2220 = vst.msk [vmem:[%s359 + $0xb8] sm:$0xff] %vm410, %v2188
      %2221 = vst.msk [vmem:[%s359 + $0xc0] sm:$0xff] %vm410, %v2189
      %2222 = vst.msk [vmem:[%s359 + $0xc8] sm:$0xff] %vm410, %v2190
      %2223 = vst.msk [vmem:[%s359 + $0xd0] sm:$0xff] %vm410, %v2191
      %2224 = vst.msk [vmem:[%s359 + $0xd8] sm:$0xff] %vm410, %v2192
      %2225 = vst.msk [vmem:[%s359 + $0xe0] sm:$0xff] %vm410, %v2193
      %2226 = vst.msk [vmem:[%s359 + $0xe8] sm:$0xff] %vm410, %v2194
      %2227 = vst.msk [vmem:[%s359 + $0xf0] sm:$0xff] %vm410, %v2195
      %2228 = vst.msk [vmem:[%s359 + $0xf8] sm:$0xff] %vm410, %v2196
      %p2229 = scmp.lt.s32.totalorder %s21, 1
      %s2230 = scalar_select %p2229, %s21, 1
      %s2231 = smul.addr %s2230, 32
      %s2232 = smul.addr %s2231, 8
      %s2233 = scalar_lea.vmem %s10, %s2232
      // Predicated region
      $region61: #{tpu_custom_call.1} parent=59 // pred_check
        %p2234 = pneg %p254
      $region62: #{tpu_custom_call.1} parent=59 // pred_check_branch
        %2236 = sbr.rel (%p2234) target = $region64
      $region63: #{tpu_custom_call.1} parent=59 // pred_region
        _
      $region64: #{tpu_custom_call.1} parent=59 // pred_fallthru
        _
    $region60: #{tpu_custom_call.1} parent=5 // pred_fallthru
      _
    %p2237 = scmp.le.s32.totalorder 2, %s16
    // Predicated region
    $region65: #{tpu_custom_call.1} parent=5 // pred_check
      %p2238 = pneg %p2237
    $region66: #{tpu_custom_call.1} parent=5 // pred_check_branch
      %2240 = sbr.rel (%p2238) target = $region68
    $region67: #{tpu_custom_call.1} parent=5 // pred_region
      %s2241 = ssub.s32 %s16, 2
      // Predicated region
      $region69: #{tpu_custom_call.1} parent=67 // pred_check
        %p2242 = pneg %p260
      $region70: #{tpu_custom_call.1} parent=67 // pred_check_branch
        %2244 = sbr.rel (%p2242) target = $region72
      $region71: #{tpu_custom_call.1} parent=67 // pred_region
        %p2245 = scmp.lt.s32.totalorder %s22, 1
        %s2246 = scalar_select %p2245, %s22, 1
        %s2247 = smul.addr %s2246, 32
        %s2248 = smul.addr %s2247, 8
        %s2249 = scalar_lea.vmem %s10, %s2248
      $region72: #{tpu_custom_call.1} parent=67 // pred_fallthru
        _
    $region68: #{tpu_custom_call.1} parent=5 // pred_fallthru
      _
  $region6: #{tpu_custom_call.1} parent=0 // loop_footer
    %s20 = sadd.s32 1, %s16
  $region7: #{tpu_custom_call.1} parent=0 // loop_footer_branch
    %15 = sbr.rel target = $region3
  $region8: #{tpu_custom_call.1} parent=0 // loop_exit
    _

</llo_original>
